<compile_context>
chip_gen: v6e
topology: v6e:2x2x1
jax: 0.10.0
libtpu: 0.0.40
codegen_flags: <defaults>
</compile_context>

<pallas_src>
import jax
import jax.numpy as jnp
from jax import lax
from jax.experimental import pallas as pl
from jax.experimental.pallas import tpu as pltpu

# ----------------------------- configuration --------------------------------
HEADS = 4
HIDDEN = 32                  # hidden_channels == HANConv out_channels
HEAD_DIM = HIDDEN // HEADS   # 8
IN_CHANNELS = 8              # in_channels (int -> same for every node type)
N_ABC = 12                   # number of 'abc_stock' nodes
N_OTHER = 10                 # number of 'other' nodes
ORTHER_COUNT = 10            # Embedding(orther_count + 1, hidden_channels)

NODE_TYPES = ("abc_stock", "other")
EDGE_TYPES = (
    ("other", "to", "abc_stock"),
    ("abc_stock", "self", "abc_stock"),
    ("abc_stock", "rev_to", "other"),
)
# Only relations whose destination is 'abc_stock' contribute to HAN.forward's
# output; the 'other' destination output of HANConv is discarded, so the kernel
# never computes it (dead-work elimination).
ABC_RELATIONS = (EDGE_TYPES[0], EDGE_TYPES[1])

# ----------------- packed-parameter row layout (all rows 32 lanes wide, f32) -
_ROW_W_ABC = 0    # rows  0: 8  proj weight 'abc_stock'  (IN_CHANNELS, HIDDEN)
_ROW_W_OTH = 8    # rows  8:16  proj weight 'other'
_ROW_KW    = 16   # rows 16:48  semantic k_lin weight    (HIDDEN, HIDDEN)
_ROW_DW    = 48   # rows 48:80  dst-attention block matrix (HIDDEN, 32); col 4r+h used
_ROW_AS0   = 80   # rows 80:84  src-attention block rows, relation 0 (other->abc)
_ROW_AS1   = 84   # rows 84:88  src-attention block rows, relation 1 (abc self)
_ROW_HMASK = 88   # rows 88:92  head-column mask (hmask[h,c]=1 iff c//HEAD_DIM==h)
_ROW_BABC  = 92   # proj bias 'abc_stock'
_ROW_BOTH  = 93   # proj bias 'other'
_ROW_KB    = 94   # k_lin bias
_ROW_Q     = 95   # semantic attention q
_PACK_ROWS = 96


# ------------------------------ fused Pallas kernel ---------------------------
def _han_fused_kernel(x_abc_ref, x_oth_ref, adj0_ref, adj1_ref, p_ref, out_ref):
    f32 = jnp.float32

    # ---- unpack parameters (static slices of the single packed ref) ----
    w_abc = p_ref[_ROW_W_ABC:_ROW_W_ABC + IN_CHANNELS, :]
    w_oth = p_ref[_ROW_W_OTH:_ROW_W_OTH + IN_CHANNELS, :]
    kw    = p_ref[_ROW_KW:_ROW_KW + HIDDEN, :]
    dw    = p_ref[_ROW_DW:_ROW_DW + HIDDEN, :]
    as0   = p_ref[_ROW_AS0:_ROW_AS0 + HEADS, :]
    as1   = p_ref[_ROW_AS1:_ROW_AS1 + HEADS, :]
    hmask = p_ref[_ROW_HMASK:_ROW_HMASK + HEADS, :]
    b_abc = p_ref[_ROW_BABC:_ROW_BABC + 1, :]
    b_oth = p_ref[_ROW_BOTH:_ROW_BOTH + 1, :]
    kb    = p_ref[_ROW_KB:_ROW_KB + 1, :]
    q     = p_ref[_ROW_Q:_ROW_Q + 1, :]

    # ---- 1. per-node-type projections (HANConv.proj) ----
    x_abc = jnp.dot(x_abc_ref[...], w_abc, preferred_element_type=f32) + b_abc  # (12, 32)
    x_oth = jnp.dot(x_oth_ref[...], w_oth, preferred_element_type=f32) + b_oth  # (10, 32)

    # ---- 2. attention scores: 3 dots, layouts chosen so no transposes are needed
    # a_dst[:, 4*r + h] = sum_d x_abc[i, h*D+d] * lin_dst_r[h, d]   -> (Nd, H) per relation
    a_dst = jnp.dot(x_abc, dw, preferred_element_type=f32)                      # (12, 32)
    # a_src_r[h, j]    = sum_d xs[j, h*D+d] * lin_src_r[h, d]       -> (H, Ns)
    a_src0 = lax.dot_general(as0, x_oth, (((1,), (1,)), ((), ())),
                             preferred_element_type=f32)                        # (4, 10)
    a_src1 = lax.dot_general(as1, x_abc, (((1,), (1,)), ((), ())),
                             preferred_element_type=f32)                        # (4, 12)

    def relation(a_dst_cols, a_src_rows, adj, xs):
        # a_dst_cols: (Nd, H)   a_src_rows: (H, Ns)   adj: (Nd, Ns)   xs: (Ns, HIDDEN)
        edge = adj > 0.0
        attn_heads = []
        xs_blocks = []
        for h in range(HEADS):
            s = a_dst_cols[:, h:h + 1] + a_src_rows[h:h + 1, :]       # (Nd, Ns)
            s = jnp.where(s > 0.0, s, 0.2 * s)                        # leaky_relu(0.2)
            masked = jnp.where(edge, s, -1e30)
            m = jnp.max(masked, axis=-1, keepdims=True)               # (Nd, 1)
            p = jnp.where(edge, jnp.exp(masked - m), 0.0)             # exp never overflows
            denom = jnp.sum(p, axis=-1, keepdims=True)
            # EUP reciprocal; p==0 on empty rows so the result is still exactly 0
            inv = pl.reciprocal(jnp.maximum(denom, 1e-30), approx=True)
            attn_heads.append(p * inv)                                # (Nd, Ns)
            xs_blocks.append(xs * hmask[h:h + 1, :])                  # zero other heads' cols
        # single MXU dot per relation: (Nd, H*Ns) x (H*Ns, HIDDEN)
        attn_cat = jnp.concatenate(attn_heads, axis=1)
        xs_cat = jnp.concatenate(xs_blocks, axis=0)
        out = jnp.dot(attn_cat, xs_cat, preferred_element_type=f32)   # (Nd, HIDDEN)
        return jnp.maximum(out, 0.0)                                  # F.relu

    out_r0 = relation(a_dst[:, 0:HEADS], a_src0, adj0_ref[...], x_oth)            # other -> abc
    out_r1 = relation(a_dst[:, HEADS:2 * HEADS], a_src1, adj1_ref[...], x_abc)    # abc self-loop

    # ---- 3. semantic-level attention: one fused k_lin/tanh/q pass over both relations
    oc = jnp.concatenate([out_r0, out_r1], axis=0)                    # (2*Nd, 32)
    k = jnp.tanh(jnp.dot(oc, kw, preferred_element_type=f32) + kb)    # (2*Nd, 32)
    sq = jnp.sum(q * k, axis=-1, keepdims=True)                       # (2*Nd, 1)
    s0 = jnp.mean(sq[0:N_ABC], axis=0, keepdims=True)                 # (1, 1)
    s1 = jnp.mean(sq[N_ABC:2 * N_ABC], axis=0, keepdims=True)         # (1, 1)
    m = jnp.maximum(s0, s1)
    e0 = jnp.exp(s0 - m)
    e1 = jnp.exp(s1 - m)
    inv = 1.0 / (e0 + e1)
    out_ref[...] = (e0 * inv) * out_r0 + (e1 * inv) * out_r1


# ------------------------------ parameter init -------------------------------
def init_params(key):
    ks = jax.random.split(key, 16)
    idx = 0
    params = {"proj": {}, "lin_src": {}, "lin_dst": {}}
    for nt in NODE_TYPES:
        params["proj"][nt] = {
            "w": 0.1 * jax.random.normal(ks[idx], (IN_CHANNELS, HIDDEN), jnp.float32),
            "b": 0.1 * jax.random.normal(ks[idx + 1], (HIDDEN,), jnp.float32),
        }
        idx += 2
    for et in EDGE_TYPES:
        name = "__".join(et)
        params["lin_src"][name] = 0.1 * jax.random.normal(
            ks[idx], (HEADS, HEAD_DIM), jnp.float32)
        params["lin_dst"][name] = 0.1 * jax.random.normal(
            ks[idx + 1], (HEADS, HEAD_DIM), jnp.float32)
        idx += 2
    params["k_w"] = 0.1 * jax.random.normal(ks[idx], (HIDDEN, HIDDEN), jnp.float32); idx += 1
    params["k_b"] = 0.1 * jax.random.normal(ks[idx], (HIDDEN,), jnp.float32); idx += 1
    params["q"] = 0.1 * jax.random.normal(ks[idx], (1, HIDDEN), jnp.float32); idx += 1
    # nn.Embedding default init: N(0, 1)
    params["emb"] = jax.random.normal(ks[idx], (ORTHER_COUNT + 1, HIDDEN), jnp.float32)
    return params


def pack_params(params):
    """Pack all HANConv parameters used by the kernel into ONE (96, 32) f32 array.

    Done once at init time -> zero per-call wrapper-side XLA ops and a single
    parameter DMA per kernel invocation.
    """
    eye = jnp.eye(HEADS, dtype=jnp.float32)

    def expand_rows(lin):
        # (H, D) -> (H, HIDDEN): row h holds lin[h] at cols h*D:(h+1)*D, zeros elsewhere
        return (eye[:, :, None] * lin[None, :, :]).reshape(HEADS, HIDDEN)

    name0 = "__".join(ABC_RELATIONS[0])
    name1 = "__".join(ABC_RELATIONS[1])

    # dst-attention block matrix: column 4*r + h holds lin_dst_r[h] at rows h*D:(h+1)*D
    dw = jnp.zeros((HIDDEN, HIDDEN), jnp.float32)
    dw = dw.at[:, 0:HEADS].set(expand_rows(params["lin_dst"][name0]).T)
    dw = dw.at[:, HEADS:2 * HEADS].set(expand_rows(params["lin_dst"][name1]).T)

    hmask = jnp.repeat(eye, HEAD_DIM, axis=1)                          # (H, HIDDEN)

    rows = [
        params["proj"]["abc_stock"]["w"],                              # rows  0:8
        params["proj"]["other"]["w"],                                  # rows  8:16
        params["k_w"],                                                 # rows 16:48
        dw,                                                            # rows 48:80
        expand_rows(params["lin_src"][name0]),                         # rows 80:84
        expand_rows(params["lin_src"][name1]),                         # rows 84:88
        hmask,                                                         # rows 88:92
        params["proj"]["abc_stock"]["b"].reshape(1, HIDDEN),           # row  92
        params["proj"]["other"]["b"].reshape(1, HIDDEN),               # row  93
        params["k_b"].reshape(1, HIDDEN),                              # row  94
        params["q"].reshape(1, HIDDEN),                                # row  95
    ]
    pack = jnp.concatenate(rows, axis=0)
    assert pack.shape == (_PACK_ROWS, HIDDEN), pack.shape
    return pack


# -------------------------------- forward ------------------------------------
def han_forward(x_dict, adj_dict, p_pack, emb_weight):
    vmem = pl.BlockSpec(memory_space=pltpu.MemorySpace.VMEM)
    out_abc = pl.pallas_call(
        _han_fused_kernel,
        out_shape=jax.ShapeDtypeStruct((N_ABC, HIDDEN), jnp.float32),
        in_specs=[vmem] * 5,
        out_specs=vmem,
    )(
        x_dict["abc_stock"],
        x_dict["other"],
        adj_dict[ABC_RELATIONS[0]],
        adj_dict[ABC_RELATIONS[1]],
        p_pack,
    )
    # HAN.forward: output = x['abc_stock']; return (output, self.embedding.weight)
    # (embedding.weight is a parameter pass-through; no compute to fuse)
    return out_abc, emb_weight


# --------------------------------- main ---------------------------------------
if __name__ == "__main__":
    key = jax.random.PRNGKey(0)
    kx1, kx2, ke1, ke2, ke3, kp = jax.random.split(key, 6)

    x_dict = {
        "abc_stock": jax.random.normal(kx1, (N_ABC, IN_CHANNELS), jnp.float32),
        "other": jax.random.normal(kx2, (N_OTHER, IN_CHANNELS), jnp.float32),
    }

    def rand_adj(k, nd, ns):
        # dense 0/1 adjacency mask, adj[dst, src]
        return (jax.random.uniform(k, (nd, ns)) < 0.4).astype(jnp.float32)

    # Full hetero-graph connectivity (the 'rev_to' relation exists in the data but
    # only feeds the discarded 'other' output, so the kernel never touches it).
    adj_dict = {
        ("other", "to", "abc_stock"): rand_adj(ke1, N_ABC, N_OTHER),
        ("abc_stock", "self", "abc_stock"): rand_adj(ke2, N_ABC, N_ABC),
        ("abc_stock", "rev_to", "other"): rand_adj(ke3, N_OTHER, N_ABC),
    }

    params = init_params(kp)
    p_pack = pack_params(params)          # one-time packing (init-time, not per call)
    emb_weight = params["emb"]

    fwd = jax.jit(han_forward)
    out, emb = fwd(x_dict, adj_dict, p_pack, emb_weight)
    jax.block_until_ready((out, emb))

    assert out.shape == (N_ABC, HIDDEN), out.shape
    assert emb.shape == (ORTHER_COUNT + 1, HIDDEN), emb.shape
    assert bool(jnp.all(jnp.isfinite(out)))
    assert bool(jnp.all(jnp.isfinite(emb)))
    print("KERNEL_OK")
</pallas_src>

<mosaic_0001>
module attributes {stable_mosaic.version = 11 : i64} {
  func.func @_han_fused_kernel(%arg0: memref<12x8xf32, #tpu.memory_space<vmem>>, %arg1: memref<10x8xf32, #tpu.memory_space<vmem>>, %arg2: memref<12x10xf32, #tpu.memory_space<vmem>>, %arg3: memref<12x12xf32, #tpu.memory_space<vmem>>, %arg4: memref<96x32xf32, #tpu.memory_space<vmem>>, %arg5: memref<12x32xf32, #tpu.memory_space<vmem>>) attributes {dimension_semantics = [], scalar_prefetch = 0 : i64, scratch_operands = 0 : i64, tpu.core_type = #tpu.core_type<tc>} {
    %c0 = arith.constant 0 : index
    %c0_0 = arith.constant 0 : index
    %0 = vector.load %arg4[%c0, %c0_0] : memref<96x32xf32, #tpu.memory_space<vmem>>, vector<8x32xf32>
    %c8 = arith.constant 8 : index
    %c0_1 = arith.constant 0 : index
    %1 = vector.load %arg4[%c8, %c0_1] : memref<96x32xf32, #tpu.memory_space<vmem>>, vector<8x32xf32>
    %c16 = arith.constant 16 : index
    %c0_2 = arith.constant 0 : index
    %2 = vector.load %arg4[%c16, %c0_2] : memref<96x32xf32, #tpu.memory_space<vmem>>, vector<32x32xf32>
    %c48 = arith.constant 48 : index
    %c0_3 = arith.constant 0 : index
    %3 = vector.load %arg4[%c48, %c0_3] : memref<96x32xf32, #tpu.memory_space<vmem>>, vector<32x32xf32>
    %c80 = arith.constant 80 : index
    %c0_4 = arith.constant 0 : index
    %4 = vector.load %arg4[%c80, %c0_4] : memref<96x32xf32, #tpu.memory_space<vmem>>, vector<4x32xf32>
    %c84 = arith.constant 84 : index
    %c0_5 = arith.constant 0 : index
    %5 = vector.load %arg4[%c84, %c0_5] : memref<96x32xf32, #tpu.memory_space<vmem>>, vector<4x32xf32>
    %c88 = arith.constant 88 : index
    %c0_6 = arith.constant 0 : index
    %6 = vector.load %arg4[%c88, %c0_6] : memref<96x32xf32, #tpu.memory_space<vmem>>, vector<4x32xf32>
    %c92 = arith.constant 92 : index
    %c0_7 = arith.constant 0 : index
    %7 = vector.load %arg4[%c92, %c0_7] : memref<96x32xf32, #tpu.memory_space<vmem>>, vector<1x32xf32>
    %c93 = arith.constant 93 : index
    %c0_8 = arith.constant 0 : index
    %8 = vector.load %arg4[%c93, %c0_8] : memref<96x32xf32, #tpu.memory_space<vmem>>, vector<1x32xf32>
    %c94 = arith.constant 94 : index
    %c0_9 = arith.constant 0 : index
    %9 = vector.load %arg4[%c94, %c0_9] : memref<96x32xf32, #tpu.memory_space<vmem>>, vector<1x32xf32>
    %c95 = arith.constant 95 : index
    %c0_10 = arith.constant 0 : index
    %10 = vector.load %arg4[%c95, %c0_10] : memref<96x32xf32, #tpu.memory_space<vmem>>, vector<1x32xf32>
    %c0_11 = arith.constant 0 : index
    %c0_12 = arith.constant 0 : index
    %11 = vector.load %arg0[%c0_11, %c0_12] : memref<12x8xf32, #tpu.memory_space<vmem>>, vector<12x8xf32>
    %cst = arith.constant dense<0.000000e+00> : vector<12x32xf32>
    %12 = tpu.matmul %11, %0, %cst {dimension_numbers = #tpu.dot_dimension_numbers<[1], [0], [0], [1], [0, 0, 1, 1], [], []>} : vector<12x8xf32>, vector<8x32xf32>, vector<12x32xf32> -> vector<12x32xf32>
    %13 = vector.broadcast %7 : vector<1x32xf32> to vector<12x32xf32>
    %14 = arith.addf %12, %13 : vector<12x32xf32>
    %c0_13 = arith.constant 0 : index
    %c0_14 = arith.constant 0 : index
    %15 = vector.load %arg1[%c0_13, %c0_14] : memref<10x8xf32, #tpu.memory_space<vmem>>, vector<10x8xf32>
    %cst_15 = arith.constant dense<0.000000e+00> : vector<10x32xf32>
    %16 = tpu.matmul %15, %1, %cst_15 {dimension_numbers = #tpu.dot_dimension_numbers<[1], [0], [0], [1], [0, 0, 1, 1], [], []>} : vector<10x8xf32>, vector<8x32xf32>, vector<10x32xf32> -> vector<10x32xf32>
    %17 = vector.broadcast %8 : vector<1x32xf32> to vector<10x32xf32>
    %18 = arith.addf %16, %17 : vector<10x32xf32>
    %cst_16 = arith.constant dense<0.000000e+00> : vector<12x32xf32>
    %19 = tpu.matmul %14, %3, %cst_16 {dimension_numbers = #tpu.dot_dimension_numbers<[1], [0], [0], [1], [0, 0, 1, 1], [], []>} : vector<12x32xf32>, vector<32x32xf32>, vector<12x32xf32> -> vector<12x32xf32>
    %cst_17 = arith.constant dense<0.000000e+00> : vector<4x10xf32>
    %20 = tpu.matmul %4, %18, %cst_17 {dimension_numbers = #tpu.dot_dimension_numbers<[1], [1], [0], [0], [0, 0, 1, 0], [], []>} : vector<4x32xf32>, vector<10x32xf32>, vector<4x10xf32> -> vector<4x10xf32>
    %cst_18 = arith.constant dense<0.000000e+00> : vector<4x12xf32>
    %21 = tpu.matmul %5, %14, %cst_18 {dimension_numbers = #tpu.dot_dimension_numbers<[1], [1], [0], [0], [0, 0, 1, 0], [], []>} : vector<4x32xf32>, vector<12x32xf32>, vector<4x12xf32> -> vector<4x12xf32>
    %22 = vector.extract_strided_slice %19 {offsets = [0, 0], sizes = [12, 4], strides = [1, 1]} : vector<12x32xf32> to vector<12x4xf32>
    %c0_19 = arith.constant 0 : index
    %c0_20 = arith.constant 0 : index
    %23 = vector.load %arg2[%c0_19, %c0_20] : memref<12x10xf32, #tpu.memory_space<vmem>>, vector<12x10xf32>
    %cst_21 = arith.constant 0.000000e+00 : f32
    %24 = vector.broadcast %cst_21 : f32 to vector<12x10xf32>
    %25 = arith.cmpf ogt, %23, %24 : vector<12x10xf32>
    %26 = vector.extract_strided_slice %22 {offsets = [0, 0], sizes = [12, 1], strides = [1, 1]} : vector<12x4xf32> to vector<12x1xf32>
    %27 = vector.extract_strided_slice %20 {offsets = [0, 0], sizes = [1, 10], strides = [1, 1]} : vector<4x10xf32> to vector<1x10xf32>
    %28 = vector.broadcast %26 : vector<12x1xf32> to vector<12x10xf32>
    %29 = vector.broadcast %27 : vector<1x10xf32> to vector<12x10xf32>
    %30 = arith.addf %28, %29 : vector<12x10xf32>
    %cst_22 = arith.constant 0.000000e+00 : f32
    %31 = vector.broadcast %cst_22 : f32 to vector<12x10xf32>
    %32 = arith.cmpf ogt, %30, %31 : vector<12x10xf32>
    %cst_23 = arith.constant 2.000000e-01 : f32
    %33 = vector.broadcast %cst_23 : f32 to vector<12x10xf32>
    %34 = arith.mulf %33, %30 : vector<12x10xf32>
    %35 = arith.select %32, %30, %34 : vector<12x10xi1>, vector<12x10xf32>
    %cst_24 = arith.constant -1.000000e+30 : f32
    %36 = vector.broadcast %cst_24 : f32 to vector<12x10xf32>
    %37 = arith.select %25, %35, %36 : vector<12x10xi1>, vector<12x10xf32>
    %cst_25 = arith.constant dense<0xFF800000> : vector<12xf32>
    %38 = vector.multi_reduction <maximumf>, %37, %cst_25 [1] : vector<12x10xf32> to vector<12xf32>
    %39 = vector.shape_cast %38 : vector<12xf32> to vector<12x1xf32>
    %40 = vector.broadcast %39 : vector<12x1xf32> to vector<12x10xf32>
    %41 = arith.subf %37, %40 : vector<12x10xf32>
    %42 = math.exp %41 : vector<12x10xf32>
    %cst_26 = arith.constant 0.000000e+00 : f32
    %43 = vector.broadcast %cst_26 : f32 to vector<12x10xf32>
    %44 = arith.select %25, %42, %43 : vector<12x10xi1>, vector<12x10xf32>
    %cst_27 = arith.constant dense<0.000000e+00> : vector<12xf32>
    %45 = vector.multi_reduction <add>, %44, %cst_27 [1] : vector<12x10xf32> to vector<12xf32>
    %46 = vector.shape_cast %45 : vector<12xf32> to vector<12x1xf32>
    %cst_28 = arith.constant 1.000000e-30 : f32
    %47 = vector.broadcast %cst_28 : f32 to vector<12x1xf32>
    %48 = arith.maximumf %46, %47 : vector<12x1xf32>
    %49 = tpu.reciprocal %48 {approx = true} : vector<12x1xf32> -> vector<12x1xf32>
    %50 = vector.broadcast %49 : vector<12x1xf32> to vector<12x10xf32>
    %51 = arith.mulf %44, %50 : vector<12x10xf32>
    %52 = vector.extract_strided_slice %6 {offsets = [0, 0], sizes = [1, 32], strides = [1, 1]} : vector<4x32xf32> to vector<1x32xf32>
    %53 = vector.broadcast %52 : vector<1x32xf32> to vector<10x32xf32>
    %54 = arith.mulf %18, %53 : vector<10x32xf32>
    %55 = vector.extract_strided_slice %22 {offsets = [0, 1], sizes = [12, 1], strides = [1, 1]} : vector<12x4xf32> to vector<12x1xf32>
    %56 = vector.extract_strided_slice %20 {offsets = [1, 0], sizes = [1, 10], strides = [1, 1]} : vector<4x10xf32> to vector<1x10xf32>
    %57 = vector.broadcast %55 : vector<12x1xf32> to vector<12x10xf32>
    %58 = vector.broadcast %56 : vector<1x10xf32> to vector<12x10xf32>
    %59 = arith.addf %57, %58 : vector<12x10xf32>
    %cst_29 = arith.constant 0.000000e+00 : f32
    %60 = vector.broadcast %cst_29 : f32 to vector<12x10xf32>
    %61 = arith.cmpf ogt, %59, %60 : vector<12x10xf32>
    %cst_30 = arith.constant 2.000000e-01 : f32
    %62 = vector.broadcast %cst_30 : f32 to vector<12x10xf32>
    %63 = arith.mulf %62, %59 : vector<12x10xf32>
    %64 = arith.select %61, %59, %63 : vector<12x10xi1>, vector<12x10xf32>
    %cst_31 = arith.constant -1.000000e+30 : f32
    %65 = vector.broadcast %cst_31 : f32 to vector<12x10xf32>
    %66 = arith.select %25, %64, %65 : vector<12x10xi1>, vector<12x10xf32>
    %cst_32 = arith.constant dense<0xFF800000> : vector<12xf32>
    %67 = vector.multi_reduction <maximumf>, %66, %cst_32 [1] : vector<12x10xf32> to vector<12xf32>
    %68 = vector.shape_cast %67 : vector<12xf32> to vector<12x1xf32>
    %69 = vector.broadcast %68 : vector<12x1xf32> to vector<12x10xf32>
    %70 = arith.subf %66, %69 : vector<12x10xf32>
    %71 = math.exp %70 : vector<12x10xf32>
    %cst_33 = arith.constant 0.000000e+00 : f32
    %72 = vector.broadcast %cst_33 : f32 to vector<12x10xf32>
    %73 = arith.select %25, %71, %72 : vector<12x10xi1>, vector<12x10xf32>
    %cst_34 = arith.constant dense<0.000000e+00> : vector<12xf32>
    %74 = vector.multi_reduction <add>, %73, %cst_34 [1] : vector<12x10xf32> to vector<12xf32>
    %75 = vector.shape_cast %74 : vector<12xf32> to vector<12x1xf32>
    %cst_35 = arith.constant 1.000000e-30 : f32
    %76 = vector.broadcast %cst_35 : f32 to vector<12x1xf32>
    %77 = arith.maximumf %75, %76 : vector<12x1xf32>
    %78 = tpu.reciprocal %77 {approx = true} : vector<12x1xf32> -> vector<12x1xf32>
    %79 = vector.broadcast %78 : vector<12x1xf32> to vector<12x10xf32>
    %80 = arith.mulf %73, %79 : vector<12x10xf32>
    %81 = vector.extract_strided_slice %6 {offsets = [1, 0], sizes = [1, 32], strides = [1, 1]} : vector<4x32xf32> to vector<1x32xf32>
    %82 = vector.broadcast %81 : vector<1x32xf32> to vector<10x32xf32>
    %83 = arith.mulf %18, %82 : vector<10x32xf32>
    %84 = vector.extract_strided_slice %22 {offsets = [0, 2], sizes = [12, 1], strides = [1, 1]} : vector<12x4xf32> to vector<12x1xf32>
    %85 = vector.extract_strided_slice %20 {offsets = [2, 0], sizes = [1, 10], strides = [1, 1]} : vector<4x10xf32> to vector<1x10xf32>
    %86 = vector.broadcast %84 : vector<12x1xf32> to vector<12x10xf32>
    %87 = vector.broadcast %85 : vector<1x10xf32> to vector<12x10xf32>
    %88 = arith.addf %86, %87 : vector<12x10xf32>
    %cst_36 = arith.constant 0.000000e+00 : f32
    %89 = vector.broadcast %cst_36 : f32 to vector<12x10xf32>
    %90 = arith.cmpf ogt, %88, %89 : vector<12x10xf32>
    %cst_37 = arith.constant 2.000000e-01 : f32
    %91 = vector.broadcast %cst_37 : f32 to vector<12x10xf32>
    %92 = arith.mulf %91, %88 : vector<12x10xf32>
    %93 = arith.select %90, %88, %92 : vector<12x10xi1>, vector<12x10xf32>
    %cst_38 = arith.constant -1.000000e+30 : f32
    %94 = vector.broadcast %cst_38 : f32 to vector<12x10xf32>
    %95 = arith.select %25, %93, %94 : vector<12x10xi1>, vector<12x10xf32>
    %cst_39 = arith.constant dense<0xFF800000> : vector<12xf32>
    %96 = vector.multi_reduction <maximumf>, %95, %cst_39 [1] : vector<12x10xf32> to vector<12xf32>
    %97 = vector.shape_cast %96 : vector<12xf32> to vector<12x1xf32>
    %98 = vector.broadcast %97 : vector<12x1xf32> to vector<12x10xf32>
    %99 = arith.subf %95, %98 : vector<12x10xf32>
    %100 = math.exp %99 : vector<12x10xf32>
    %cst_40 = arith.constant 0.000000e+00 : f32
    %101 = vector.broadcast %cst_40 : f32 to vector<12x10xf32>
    %102 = arith.select %25, %100, %101 : vector<12x10xi1>, vector<12x10xf32>
    %cst_41 = arith.constant dense<0.000000e+00> : vector<12xf32>
    %103 = vector.multi_reduction <add>, %102, %cst_41 [1] : vector<12x10xf32> to vector<12xf32>
    %104 = vector.shape_cast %103 : vector<12xf32> to vector<12x1xf32>
    %cst_42 = arith.constant 1.000000e-30 : f32
    %105 = vector.broadcast %cst_42 : f32 to vector<12x1xf32>
    %106 = arith.maximumf %104, %105 : vector<12x1xf32>
    %107 = tpu.reciprocal %106 {approx = true} : vector<12x1xf32> -> vector<12x1xf32>
    %108 = vector.broadcast %107 : vector<12x1xf32> to vector<12x10xf32>
    %109 = arith.mulf %102, %108 : vector<12x10xf32>
    %110 = vector.extract_strided_slice %6 {offsets = [2, 0], sizes = [1, 32], strides = [1, 1]} : vector<4x32xf32> to vector<1x32xf32>
    %111 = vector.broadcast %110 : vector<1x32xf32> to vector<10x32xf32>
    %112 = arith.mulf %18, %111 : vector<10x32xf32>
    %113 = vector.extract_strided_slice %22 {offsets = [0, 3], sizes = [12, 1], strides = [1, 1]} : vector<12x4xf32> to vector<12x1xf32>
    %114 = vector.extract_strided_slice %20 {offsets = [3, 0], sizes = [1, 10], strides = [1, 1]} : vector<4x10xf32> to vector<1x10xf32>
    %115 = vector.broadcast %113 : vector<12x1xf32> to vector<12x10xf32>
    %116 = vector.broadcast %114 : vector<1x10xf32> to vector<12x10xf32>
    %117 = arith.addf %115, %116 : vector<12x10xf32>
    %cst_43 = arith.constant 0.000000e+00 : f32
    %118 = vector.broadcast %cst_43 : f32 to vector<12x10xf32>
    %119 = arith.cmpf ogt, %117, %118 : vector<12x10xf32>
    %cst_44 = arith.constant 2.000000e-01 : f32
    %120 = vector.broadcast %cst_44 : f32 to vector<12x10xf32>
    %121 = arith.mulf %120, %117 : vector<12x10xf32>
    %122 = arith.select %119, %117, %121 : vector<12x10xi1>, vector<12x10xf32>
    %cst_45 = arith.constant -1.000000e+30 : f32
    %123 = vector.broadcast %cst_45 : f32 to vector<12x10xf32>
    %124 = arith.select %25, %122, %123 : vector<12x10xi1>, vector<12x10xf32>
    %cst_46 = arith.constant dense<0xFF800000> : vector<12xf32>
    %125 = vector.multi_reduction <maximumf>, %124, %cst_46 [1] : vector<12x10xf32> to vector<12xf32>
    %126 = vector.shape_cast %125 : vector<12xf32> to vector<12x1xf32>
    %127 = vector.broadcast %126 : vector<12x1xf32> to vector<12x10xf32>
    %128 = arith.subf %124, %127 : vector<12x10xf32>
    %129 = math.exp %128 : vector<12x10xf32>
    %cst_47 = arith.constant 0.000000e+00 : f32
    %130 = vector.broadcast %cst_47 : f32 to vector<12x10xf32>
    %131 = arith.select %25, %129, %130 : vector<12x10xi1>, vector<12x10xf32>
    %cst_48 = arith.constant dense<0.000000e+00> : vector<12xf32>
    %132 = vector.multi_reduction <add>, %131, %cst_48 [1] : vector<12x10xf32> to vector<12xf32>
    %133 = vector.shape_cast %132 : vector<12xf32> to vector<12x1xf32>
    %cst_49 = arith.constant 1.000000e-30 : f32
    %134 = vector.broadcast %cst_49 : f32 to vector<12x1xf32>
    %135 = arith.maximumf %133, %134 : vector<12x1xf32>
    %136 = tpu.reciprocal %135 {approx = true} : vector<12x1xf32> -> vector<12x1xf32>
    %137 = vector.broadcast %136 : vector<12x1xf32> to vector<12x10xf32>
    %138 = arith.mulf %131, %137 : vector<12x10xf32>
    %139 = vector.extract_strided_slice %6 {offsets = [3, 0], sizes = [1, 32], strides = [1, 1]} : vector<4x32xf32> to vector<1x32xf32>
    %140 = vector.broadcast %139 : vector<1x32xf32> to vector<10x32xf32>
    %141 = arith.mulf %18, %140 : vector<10x32xf32>
    %142 = tpu.concatenate %51, %80, %109, %138 in 1 : vector<12x10xf32>, vector<12x10xf32>, vector<12x10xf32>, vector<12x10xf32> -> vector<12x40xf32>
    %143 = tpu.concatenate %54, %83, %112, %141 in 0 : vector<10x32xf32>, vector<10x32xf32>, vector<10x32xf32>, vector<10x32xf32> -> vector<40x32xf32>
    %cst_50 = arith.constant dense<0.000000e+00> : vector<12x32xf32>
    %144 = tpu.matmul %142, %143, %cst_50 {dimension_numbers = #tpu.dot_dimension_numbers<[1], [0], [0], [1], [0, 0, 1, 1], [], []>} : vector<12x40xf32>, vector<40x32xf32>, vector<12x32xf32> -> vector<12x32xf32>
    %cst_51 = arith.constant 0.000000e+00 : f32
    %145 = vector.broadcast %cst_51 : f32 to vector<12x32xf32>
    %146 = arith.maximumf %144, %145 : vector<12x32xf32>
    %147 = vector.extract_strided_slice %19 {offsets = [0, 4], sizes = [12, 4], strides = [1, 1]} : vector<12x32xf32> to vector<12x4xf32>
    %c0_52 = arith.constant 0 : index
    %c0_53 = arith.constant 0 : index
    %148 = vector.load %arg3[%c0_52, %c0_53] : memref<12x12xf32, #tpu.memory_space<vmem>>, vector<12x12xf32>
    %cst_54 = arith.constant 0.000000e+00 : f32
    %149 = vector.broadcast %cst_54 : f32 to vector<12x12xf32>
    %150 = arith.cmpf ogt, %148, %149 : vector<12x12xf32>
    %151 = vector.extract_strided_slice %147 {offsets = [0, 0], sizes = [12, 1], strides = [1, 1]} : vector<12x4xf32> to vector<12x1xf32>
    %152 = vector.extract_strided_slice %21 {offsets = [0, 0], sizes = [1, 12], strides = [1, 1]} : vector<4x12xf32> to vector<1x12xf32>
    %153 = vector.broadcast %151 : vector<12x1xf32> to vector<12x12xf32>
    %154 = vector.broadcast %152 : vector<1x12xf32> to vector<12x12xf32>
    %155 = arith.addf %153, %154 : vector<12x12xf32>
    %cst_55 = arith.constant 0.000000e+00 : f32
    %156 = vector.broadcast %cst_55 : f32 to vector<12x12xf32>
    %157 = arith.cmpf ogt, %155, %156 : vector<12x12xf32>
    %cst_56 = arith.constant 2.000000e-01 : f32
    %158 = vector.broadcast %cst_56 : f32 to vector<12x12xf32>
    %159 = arith.mulf %158, %155 : vector<12x12xf32>
    %160 = arith.select %157, %155, %159 : vector<12x12xi1>, vector<12x12xf32>
    %cst_57 = arith.constant -1.000000e+30 : f32
    %161 = vector.broadcast %cst_57 : f32 to vector<12x12xf32>
    %162 = arith.select %150, %160, %161 : vector<12x12xi1>, vector<12x12xf32>
    %cst_58 = arith.constant dense<0xFF800000> : vector<12xf32>
    %163 = vector.multi_reduction <maximumf>, %162, %cst_58 [1] : vector<12x12xf32> to vector<12xf32>
    %164 = vector.shape_cast %163 : vector<12xf32> to vector<12x1xf32>
    %165 = vector.broadcast %164 : vector<12x1xf32> to vector<12x12xf32>
    %166 = arith.subf %162, %165 : vector<12x12xf32>
    %167 = math.exp %166 : vector<12x12xf32>
    %cst_59 = arith.constant 0.000000e+00 : f32
    %168 = vector.broadcast %cst_59 : f32 to vector<12x12xf32>
    %169 = arith.select %150, %167, %168 : vector<12x12xi1>, vector<12x12xf32>
    %cst_60 = arith.constant dense<0.000000e+00> : vector<12xf32>
    %170 = vector.multi_reduction <add>, %169, %cst_60 [1] : vector<12x12xf32> to vector<12xf32>
    %171 = vector.shape_cast %170 : vector<12xf32> to vector<12x1xf32>
    %cst_61 = arith.constant 1.000000e-30 : f32
    %172 = vector.broadcast %cst_61 : f32 to vector<12x1xf32>
    %173 = arith.maximumf %171, %172 : vector<12x1xf32>
    %174 = tpu.reciprocal %173 {approx = true} : vector<12x1xf32> -> vector<12x1xf32>
    %175 = vector.broadcast %174 : vector<12x1xf32> to vector<12x12xf32>
    %176 = arith.mulf %169, %175 : vector<12x12xf32>
    %177 = vector.extract_strided_slice %6 {offsets = [0, 0], sizes = [1, 32], strides = [1, 1]} : vector<4x32xf32> to vector<1x32xf32>
    %178 = vector.broadcast %177 : vector<1x32xf32> to vector<12x32xf32>
    %179 = arith.mulf %14, %178 : vector<12x32xf32>
    %180 = vector.extract_strided_slice %147 {offsets = [0, 1], sizes = [12, 1], strides = [1, 1]} : vector<12x4xf32> to vector<12x1xf32>
    %181 = vector.extract_strided_slice %21 {offsets = [1, 0], sizes = [1, 12], strides = [1, 1]} : vector<4x12xf32> to vector<1x12xf32>
    %182 = vector.broadcast %180 : vector<12x1xf32> to vector<12x12xf32>
    %183 = vector.broadcast %181 : vector<1x12xf32> to vector<12x12xf32>
    %184 = arith.addf %182, %183 : vector<12x12xf32>
    %cst_62 = arith.constant 0.000000e+00 : f32
    %185 = vector.broadcast %cst_62 : f32 to vector<12x12xf32>
    %186 = arith.cmpf ogt, %184, %185 : vector<12x12xf32>
    %cst_63 = arith.constant 2.000000e-01 : f32
    %187 = vector.broadcast %cst_63 : f32 to vector<12x12xf32>
    %188 = arith.mulf %187, %184 : vector<12x12xf32>
    %189 = arith.select %186, %184, %188 : vector<12x12xi1>, vector<12x12xf32>
    %cst_64 = arith.constant -1.000000e+30 : f32
    %190 = vector.broadcast %cst_64 : f32 to vector<12x12xf32>
    %191 = arith.select %150, %189, %190 : vector<12x12xi1>, vector<12x12xf32>
    %cst_65 = arith.constant dense<0xFF800000> : vector<12xf32>
    %192 = vector.multi_reduction <maximumf>, %191, %cst_65 [1] : vector<12x12xf32> to vector<12xf32>
    %193 = vector.shape_cast %192 : vector<12xf32> to vector<12x1xf32>
    %194 = vector.broadcast %193 : vector<12x1xf32> to vector<12x12xf32>
    %195 = arith.subf %191, %194 : vector<12x12xf32>
    %196 = math.exp %195 : vector<12x12xf32>
    %cst_66 = arith.constant 0.000000e+00 : f32
    %197 = vector.broadcast %cst_66 : f32 to vector<12x12xf32>
    %198 = arith.select %150, %196, %197 : vector<12x12xi1>, vector<12x12xf32>
    %cst_67 = arith.constant dense<0.000000e+00> : vector<12xf32>
    %199 = vector.multi_reduction <add>, %198, %cst_67 [1] : vector<12x12xf32> to vector<12xf32>
    %200 = vector.shape_cast %199 : vector<12xf32> to vector<12x1xf32>
    %cst_68 = arith.constant 1.000000e-30 : f32
    %201 = vector.broadcast %cst_68 : f32 to vector<12x1xf32>
    %202 = arith.maximumf %200, %201 : vector<12x1xf32>
    %203 = tpu.reciprocal %202 {approx = true} : vector<12x1xf32> -> vector<12x1xf32>
    %204 = vector.broadcast %203 : vector<12x1xf32> to vector<12x12xf32>
    %205 = arith.mulf %198, %204 : vector<12x12xf32>
    %206 = vector.extract_strided_slice %6 {offsets = [1, 0], sizes = [1, 32], strides = [1, 1]} : vector<4x32xf32> to vector<1x32xf32>
    %207 = vector.broadcast %206 : vector<1x32xf32> to vector<12x32xf32>
    %208 = arith.mulf %14, %207 : vector<12x32xf32>
    %209 = vector.extract_strided_slice %147 {offsets = [0, 2], sizes = [12, 1], strides = [1, 1]} : vector<12x4xf32> to vector<12x1xf32>
    %210 = vector.extract_strided_slice %21 {offsets = [2, 0], sizes = [1, 12], strides = [1, 1]} : vector<4x12xf32> to vector<1x12xf32>
    %211 = vector.broadcast %209 : vector<12x1xf32> to vector<12x12xf32>
    %212 = vector.broadcast %210 : vector<1x12xf32> to vector<12x12xf32>
    %213 = arith.addf %211, %212 : vector<12x12xf32>
    %cst_69 = arith.constant 0.000000e+00 : f32
    %214 = vector.broadcast %cst_69 : f32 to vector<12x12xf32>
    %215 = arith.cmpf ogt, %213, %214 : vector<12x12xf32>
    %cst_70 = arith.constant 2.000000e-01 : f32
    %216 = vector.broadcast %cst_70 : f32 to vector<12x12xf32>
    %217 = arith.mulf %216, %213 : vector<12x12xf32>
    %218 = arith.select %215, %213, %217 : vector<12x12xi1>, vector<12x12xf32>
    %cst_71 = arith.constant -1.000000e+30 : f32
    %219 = vector.broadcast %cst_71 : f32 to vector<12x12xf32>
    %220 = arith.select %150, %218, %219 : vector<12x12xi1>, vector<12x12xf32>
    %cst_72 = arith.constant dense<0xFF800000> : vector<12xf32>
    %221 = vector.multi_reduction <maximumf>, %220, %cst_72 [1] : vector<12x12xf32> to vector<12xf32>
    %222 = vector.shape_cast %221 : vector<12xf32> to vector<12x1xf32>
    %223 = vector.broadcast %222 : vector<12x1xf32> to vector<12x12xf32>
    %224 = arith.subf %220, %223 : vector<12x12xf32>
    %225 = math.exp %224 : vector<12x12xf32>
    %cst_73 = arith.constant 0.000000e+00 : f32
    %226 = vector.broadcast %cst_73 : f32 to vector<12x12xf32>
    %227 = arith.select %150, %225, %226 : vector<12x12xi1>, vector<12x12xf32>
    %cst_74 = arith.constant dense<0.000000e+00> : vector<12xf32>
    %228 = vector.multi_reduction <add>, %227, %cst_74 [1] : vector<12x12xf32> to vector<12xf32>
    %229 = vector.shape_cast %228 : vector<12xf32> to vector<12x1xf32>
    %cst_75 = arith.constant 1.000000e-30 : f32
    %230 = vector.broadcast %cst_75 : f32 to vector<12x1xf32>
    %231 = arith.maximumf %229, %230 : vector<12x1xf32>
    %232 = tpu.reciprocal %231 {approx = true} : vector<12x1xf32> -> vector<12x1xf32>
    %233 = vector.broadcast %232 : vector<12x1xf32> to vector<12x12xf32>
    %234 = arith.mulf %227, %233 : vector<12x12xf32>
    %235 = vector.extract_strided_slice %6 {offsets = [2, 0], sizes = [1, 32], strides = [1, 1]} : vector<4x32xf32> to vector<1x32xf32>
    %236 = vector.broadcast %235 : vector<1x32xf32> to vector<12x32xf32>
    %237 = arith.mulf %14, %236 : vector<12x32xf32>
    %238 = vector.extract_strided_slice %147 {offsets = [0, 3], sizes = [12, 1], strides = [1, 1]} : vector<12x4xf32> to vector<12x1xf32>
    %239 = vector.extract_strided_slice %21 {offsets = [3, 0], sizes = [1, 12], strides = [1, 1]} : vector<4x12xf32> to vector<1x12xf32>
    %240 = vector.broadcast %238 : vector<12x1xf32> to vector<12x12xf32>
    %241 = vector.broadcast %239 : vector<1x12xf32> to vector<12x12xf32>
    %242 = arith.addf %240, %241 : vector<12x12xf32>
    %cst_76 = arith.constant 0.000000e+00 : f32
    %243 = vector.broadcast %cst_76 : f32 to vector<12x12xf32>
    %244 = arith.cmpf ogt, %242, %243 : vector<12x12xf32>
    %cst_77 = arith.constant 2.000000e-01 : f32
    %245 = vector.broadcast %cst_77 : f32 to vector<12x12xf32>
    %246 = arith.mulf %245, %242 : vector<12x12xf32>
    %247 = arith.select %244, %242, %246 : vector<12x12xi1>, vector<12x12xf32>
    %cst_78 = arith.constant -1.000000e+30 : f32
    %248 = vector.broadcast %cst_78 : f32 to vector<12x12xf32>
    %249 = arith.select %150, %247, %248 : vector<12x12xi1>, vector<12x12xf32>
    %cst_79 = arith.constant dense<0xFF800000> : vector<12xf32>
    %250 = vector.multi_reduction <maximumf>, %249, %cst_79 [1] : vector<12x12xf32> to vector<12xf32>
    %251 = vector.shape_cast %250 : vector<12xf32> to vector<12x1xf32>
    %252 = vector.broadcast %251 : vector<12x1xf32> to vector<12x12xf32>
    %253 = arith.subf %249, %252 : vector<12x12xf32>
    %254 = math.exp %253 : vector<12x12xf32>
    %cst_80 = arith.constant 0.000000e+00 : f32
    %255 = vector.broadcast %cst_80 : f32 to vector<12x12xf32>
    %256 = arith.select %150, %254, %255 : vector<12x12xi1>, vector<12x12xf32>
    %cst_81 = arith.constant dense<0.000000e+00> : vector<12xf32>
    %257 = vector.multi_reduction <add>, %256, %cst_81 [1] : vector<12x12xf32> to vector<12xf32>
    %258 = vector.shape_cast %257 : vector<12xf32> to vector<12x1xf32>
    %cst_82 = arith.constant 1.000000e-30 : f32
    %259 = vector.broadcast %cst_82 : f32 to vector<12x1xf32>
    %260 = arith.maximumf %258, %259 : vector<12x1xf32>
    %261 = tpu.reciprocal %260 {approx = true} : vector<12x1xf32> -> vector<12x1xf32>
    %262 = vector.broadcast %261 : vector<12x1xf32> to vector<12x12xf32>
    %263 = arith.mulf %256, %262 : vector<12x12xf32>
    %264 = vector.extract_strided_slice %6 {offsets = [3, 0], sizes = [1, 32], strides = [1, 1]} : vector<4x32xf32> to vector<1x32xf32>
    %265 = vector.broadcast %264 : vector<1x32xf32> to vector<12x32xf32>
    %266 = arith.mulf %14, %265 : vector<12x32xf32>
    %267 = tpu.concatenate %176, %205, %234, %263 in 1 : vector<12x12xf32>, vector<12x12xf32>, vector<12x12xf32>, vector<12x12xf32> -> vector<12x48xf32>
    %268 = tpu.concatenate %179, %208, %237, %266 in 0 : vector<12x32xf32>, vector<12x32xf32>, vector<12x32xf32>, vector<12x32xf32> -> vector<48x32xf32>
    %cst_83 = arith.constant dense<0.000000e+00> : vector<12x32xf32>
    %269 = tpu.matmul %267, %268, %cst_83 {dimension_numbers = #tpu.dot_dimension_numbers<[1], [0], [0], [1], [0, 0, 1, 1], [], []>} : vector<12x48xf32>, vector<48x32xf32>, vector<12x32xf32> -> vector<12x32xf32>
    %cst_84 = arith.constant 0.000000e+00 : f32
    %270 = vector.broadcast %cst_84 : f32 to vector<12x32xf32>
    %271 = arith.maximumf %269, %270 : vector<12x32xf32>
    %272 = tpu.concatenate %146, %271 in 0 : vector<12x32xf32>, vector<12x32xf32> -> vector<24x32xf32>
    %cst_85 = arith.constant dense<0.000000e+00> : vector<24x32xf32>
    %273 = tpu.matmul %272, %2, %cst_85 {dimension_numbers = #tpu.dot_dimension_numbers<[1], [0], [0], [1], [0, 0, 1, 1], [], []>} : vector<24x32xf32>, vector<32x32xf32>, vector<24x32xf32> -> vector<24x32xf32>
    %274 = vector.broadcast %9 : vector<1x32xf32> to vector<24x32xf32>
    %275 = arith.addf %273, %274 : vector<24x32xf32>
    %276 = math.tanh %275 : vector<24x32xf32>
    %277 = vector.broadcast %10 : vector<1x32xf32> to vector<24x32xf32>
    %278 = arith.mulf %277, %276 : vector<24x32xf32>
    %cst_86 = arith.constant dense<0.000000e+00> : vector<24xf32>
    %279 = vector.multi_reduction <add>, %278, %cst_86 [1] : vector<24x32xf32> to vector<24xf32>
    %280 = vector.shape_cast %279 : vector<24xf32> to vector<24x1xf32>
    %281 = vector.extract_strided_slice %280 {offsets = [0, 0], sizes = [12, 1], strides = [1, 1]} : vector<24x1xf32> to vector<12x1xf32>
    %cst_87 = arith.constant dense<0.000000e+00> : vector<1xf32>
    %282 = vector.multi_reduction <add>, %281, %cst_87 [0] : vector<12x1xf32> to vector<1xf32>
    %283 = vector.shape_cast %282 : vector<1xf32> to vector<1x1xf32>
    %cst_88 = arith.constant 1.200000e+01 : f32
    %284 = vector.broadcast %cst_88 : f32 to vector<1x1xf32>
    %285 = arith.divf %283, %284 : vector<1x1xf32>
    %286 = vector.extract_strided_slice %280 {offsets = [12, 0], sizes = [12, 1], strides = [1, 1]} : vector<24x1xf32> to vector<12x1xf32>
    %cst_89 = arith.constant dense<0.000000e+00> : vector<1xf32>
    %287 = vector.multi_reduction <add>, %286, %cst_89 [0] : vector<12x1xf32> to vector<1xf32>
    %288 = vector.shape_cast %287 : vector<1xf32> to vector<1x1xf32>
    %cst_90 = arith.constant 1.200000e+01 : f32
    %289 = vector.broadcast %cst_90 : f32 to vector<1x1xf32>
    %290 = arith.divf %288, %289 : vector<1x1xf32>
    %291 = arith.maximumf %285, %290 : vector<1x1xf32>
    %292 = arith.subf %285, %291 : vector<1x1xf32>
    %293 = math.exp %292 : vector<1x1xf32>
    %294 = arith.subf %290, %291 : vector<1x1xf32>
    %295 = math.exp %294 : vector<1x1xf32>
    %296 = arith.addf %293, %295 : vector<1x1xf32>
    %cst_91 = arith.constant 1.000000e+00 : f32
    %297 = vector.broadcast %cst_91 : f32 to vector<1x1xf32>
    %298 = arith.divf %297, %296 : vector<1x1xf32>
    %299 = arith.mulf %293, %298 : vector<1x1xf32>
    %300 = vector.broadcast %299 : vector<1x1xf32> to vector<12x32xf32>
    %301 = arith.mulf %300, %146 : vector<12x32xf32>
    %302 = arith.mulf %295, %298 : vector<1x1xf32>
    %303 = vector.broadcast %302 : vector<1x1xf32> to vector<12x32xf32>
    %304 = arith.mulf %303, %271 : vector<12x32xf32>
    %305 = arith.addf %301, %304 : vector<12x32xf32>
    %c0_92 = arith.constant 0 : index
    %c0_93 = arith.constant 0 : index
    %306 = vector.load %arg5[%c0_92, %c0_93] : memref<12x32xf32, #tpu.memory_space<vmem>>, vector<12x32xf32>
    tpu.vector_store %arg5[%c0_92, %c0_93], %305 {strides = array<i32>} : memref<12x32xf32, #tpu.memory_space<vmem>>, vector<12x32xf32>,
    return
  }
}

</mosaic_0001>

<llo_original>
// kernel: han_forward.1
$region0: #{han_forward.1}
  #allocation0 [shape = 'u32[]', space=smem, size = 0x4, offset = 0x4, fixed_abs, tag = 'smem constant byte address 0x4 - core index']
  #allocation1 [shape = 'u32[144,128]{1,0:T(1,128)}', space=vmem, size = 0x12000, scoped, tag = 'internal scratch']
  %s0 = inlined_call_operand.vmem [shape: f32[12,8], index: 0, kind: input, shape index: {}]
  %s1 = inlined_call_operand.vmem [shape: f32[10,8], index: 1, kind: input, shape index: {}]
  %s2 = inlined_call_operand.vmem [shape: f32[12,10], index: 2, kind: input, shape index: {}]
  %s3 = inlined_call_operand.vmem [shape: f32[12,12], index: 3, kind: input, shape index: {}]
  %s4 = inlined_call_operand.vmem [shape: f32[96,32], index: 4, kind: input, shape index: {}]
  %s5 = inlined_call_operand.hbm [shape: f32[12,32], index: 5, kind: output, shape index: {}]
  %s6 = sld [smem:[#allocation0]]
  $region30: #{han_forward.1} parent=0
    _
  %s8 = ssub.s32 1, %s6
  %s9 = scalar_select 0, %s8, %s6
  $region1: #{han_forward.1} parent=0
    #allocation2 [shape = 'u8[8192]{0}', space=vmem, size = 0x2000, scoped, tag = 'output window, operand 0, single buffered']
    #allocation3 [shape = 's32[1]{0}', space=sflag, size = 0x4, scoped, tag = 'scoped memory for han_forward.1']
    %10 = vsyncpa [#allocation3], 0
    // Predicated region
    $region2: #{han_forward.1} parent=1 // pred_check
      _
    $region3: #{han_forward.1} parent=1 // pred_check_branch
      %12 = sbr.rel (0) target = $region5
    $region4: #{han_forward.1} parent=1 // pred_region
      _
    $region5: #{han_forward.1} parent=1 // pred_fallthru
      _
    // Predicated region
    $region6: #{han_forward.1} parent=1 // pred_check
      _
    $region7: #{han_forward.1} parent=1 // pred_check_branch
      %14 = sbr.rel (0) target = $region9
    $region8: #{han_forward.1} parent=1 // pred_region
      _
    $region9: #{han_forward.1} parent=1 // pred_fallthru
      _
    // Predicated region
    $region10: #{han_forward.1} parent=1 // pred_check
      _
    $region11: #{han_forward.1} parent=1 // pred_check_branch
      %16 = sbr.rel (0) target = $region13
    $region12: #{han_forward.1} parent=1 // pred_region
      _
    $region13: #{han_forward.1} parent=1 // pred_fallthru
      _
    // Predicated region
    $region14: #{han_forward.1} parent=1 // pred_check
      _
    $region15: #{han_forward.1} parent=1 // pred_check_branch
      %18 = sbr.rel (0) target = $region17
    $region16: #{han_forward.1} parent=1 // pred_region
      _
    $region17: #{han_forward.1} parent=1 // pred_fallthru
      _
    // Predicated region
    $region18: #{han_forward.1} parent=1 // pred_check
      _
    $region19: #{han_forward.1} parent=1 // pred_check_branch
      %20 = sbr.rel (0) target = $region21
    $region20: #{han_forward.1} parent=1 // pred_region
      _
    $region21: #{han_forward.1} parent=1 // pred_fallthru
      _
    %v21 = vld [vmem:[%s4] sm:$0xff]
    %v22 = vld [vmem:[%s4 + $0x8] sm:$0xff]
    %v23 = vld [vmem:[%s4 + $0x10] sm:$0xff]
    %v24 = vld [vmem:[%s4 + $0x18] sm:$0xff]
    %v25 = vld [vmem:[%s4 + $0x20] sm:$0xff]
    %v26 = vld [vmem:[%s4 + $0x28] sm:$0xff]
    %v27 = vld [vmem:[%s4 + $0x30] sm:$0xff]
    %v28 = vld [vmem:[%s4 + $0x38] sm:$0xff]
    %v29 = vld [vmem:[%s4 + $0x40] sm:$0xff]
    %v30 = vld [vmem:[%s4 + $0x48] sm:$0xff]
    %v31 = vld [vmem:[%s4 + $0x50] sm:$0xf]
    %v32 = vld [vmem:[%s4 + $0x54] sm:$0xf]
    %v33 = vld [vmem:[%s4 + $0x58] sm:$0xf]
    %v34 = vld [vmem:[%s4 + $0x5c] sm:$0x1]
    %v35 = vld [vmem:[%s4 + $0x5d] sm:$0x1]
    %v36 = vld [vmem:[%s4 + $0x5e] sm:$0x1]
    %v37 = vld [vmem:[%s4 + $0x5f] sm:$0x1]
    %v38 = vld [vmem:[%s0] sm:$0xff]
    %v39 = vld [vmem:[%s0 + $0x8] sm:$0xf]
    %v40 = vlaneseq
    %v41 = vshrl.u32 %v40, 7
    %v42 = vsub.s32 0, %v41
    %v43 = vrot.slane %v34, %v42
    %vm44 = vcmask 64512
    %v46 = vsel %vm44, %v38, 0
    %v49 = vsel %vm44, %v39, 0
    %51 = vmatprep.subr.mxu0 0.0
    %52 = vmatpush1.msra.mxu0 0.0
    %53 = vmatprep.subr.mxu0 0.0
    %54 = vmatpush1.msra.mxu0 0.0
    %55 = vmatprep.subr.mxu0 0.0
    %56 = vmatpush1.msra.mxu0 0.0
    %57 = vmatprep.subr.mxu0 0.0
    %58 = vmatpush1.msra.mxu0 0.0
    %59 = vmatprep.subr.mxu0 0.0
    %60 = vmatpush1.msra.mxu0 0.0
    %61 = vmatprep.subr.mxu0 0.0
    %62 = vmatpush1.msra.mxu0 0.0
    %63 = vmatprep.subr.mxu0 0.0
    %64 = vmatpush1.msra.mxu0 0.0
    %65 = vmatprep.subr.mxu0 0.0
    %66 = vmatpush1.msra.mxu0 0.0
    %67 = vmatprep.subr.mxu0 0.0
    %68 = vmatpush1.msra.mxu0 0.0
    %69 = vmatprep.subr.mxu0 0.0
    %70 = vmatpush1.msra.mxu0 0.0
    %71 = vmatprep.subr.mxu0 0.0
    %72 = vmatpush1.msra.mxu0 0.0
    %73 = vmatprep.subr.mxu0 0.0
    %74 = vmatpush1.msra.mxu0 0.0
    %75 = vmatprep.subr.mxu0 0.0
    %76 = vmatpush1.msra.mxu0 0.0
    %77 = vmatprep.subr.mxu0 0.0
    %78 = vmatpush1.msra.mxu0 0.0
    %79 = vmatprep.subr.mxu0 0.0
    %80 = vmatpush1.msra.mxu0 0.0
    %81 = vmatprep.subr.mxu0 0.0
    %82 = vmatpush1.msra.mxu0 %v21
    %83 = vmatprep.subr.mxu0 0.0
    %84 = vmatpush2.msra.mxu0 0.0
    %85 = vmatprep.subr.mxu0 0.0
    %86 = vmatpush2.msra.mxu0 0.0
    %87 = vmatprep.subr.mxu0 0.0
    %88 = vmatpush2.msra.mxu0 0.0
    %89 = vmatprep.subr.mxu0 0.0
    %90 = vmatpush2.msra.mxu0 0.0
    %91 = vmatprep.subr.mxu0 0.0
    %92 = vmatpush2.msra.mxu0 0.0
    %93 = vmatprep.subr.mxu0 0.0
    %94 = vmatpush2.msra.mxu0 0.0
    %95 = vmatprep.subr.mxu0 0.0
    %96 = vmatpush2.msra.mxu0 0.0
    %97 = vmatprep.subr.mxu0 0.0
    %98 = vmatpush2.msra.mxu0 0.0
    %99 = vmatprep.subr.mxu0 0.0
    %100 = vmatpush2.msra.mxu0 0.0
    %101 = vmatprep.subr.mxu0 0.0
    %102 = vmatpush2.msra.mxu0 0.0
    %103 = vmatprep.subr.mxu0 0.0
    %104 = vmatpush2.msra.mxu0 0.0
    %105 = vmatprep.subr.mxu0 0.0
    %106 = vmatpush2.msra.mxu0 0.0
    %107 = vmatprep.subr.mxu0 0.0
    %108 = vmatpush2.msra.mxu0 0.0
    %109 = vmatprep.subr.mxu0 0.0
    %110 = vmatpush2.msra.mxu0 0.0
    %111 = vmatprep.subr.mxu0 0.0
    %112 = vmatpush2.msra.mxu0 0.0
    %113 = vmatprep.subr.mxu0 0.0
    %114 = vmatpush2.msra.mxu0 0.0
    %115 = vmatprep.mubr.f32.mxu0 0.0
    %116 = vmatmul.mubr.f32.gmra.mxu0 %v46
    %v117 = vpop.f32.mrf.mxu0
    %v118 = vadd.f32 %v43, %v117
    %v119 = vpop.f32.mrf.mxu0
    %120 = vmatprep.mubr.f32.mxu0 0.0
    %121 = vmatmul.mubr.f32.gmra.mxu0 %v49
    %v122 = vpop.f32.mrf.mxu0
    %v123 = vadd.f32 %v43, %v122
    %v124 = vpop.f32.mrf.mxu0
    %125 = vdwg.mxu0
    %v126 = vld [vmem:[%s1] sm:$0xff]
    %v127 = vld [vmem:[%s1 + $0x8] sm:$0x3]
    %v128 = vlaneseq
    %v129 = vshrl.u32 %v128, 7
    %v130 = vsub.s32 0, %v129
    %v131 = vrot.slane %v35, %v130
    %v133 = vsel %vm44, %v126, 0
    %v136 = vsel %vm44, %v127, 0
    %138 = vmatprep.subr.mxu0 0.0
    %139 = vmatpush1.msra.mxu0 0.0
    %140 = vmatprep.subr.mxu0 0.0
    %141 = vmatpush1.msra.mxu0 0.0
    %142 = vmatprep.subr.mxu0 0.0
    %143 = vmatpush1.msra.mxu0 0.0
    %144 = vmatprep.subr.mxu0 0.0
    %145 = vmatpush1.msra.mxu0 0.0
    %146 = vmatprep.subr.mxu0 0.0
    %147 = vmatpush1.msra.mxu0 0.0
    %148 = vmatprep.subr.mxu0 0.0
    %149 = vmatpush1.msra.mxu0 0.0
    %150 = vmatprep.subr.mxu0 0.0
    %151 = vmatpush1.msra.mxu0 0.0
    %152 = vmatprep.subr.mxu0 0.0
    %153 = vmatpush1.msra.mxu0 0.0
    %154 = vmatprep.subr.mxu0 0.0
    %155 = vmatpush1.msra.mxu0 0.0
    %156 = vmatprep.subr.mxu0 0.0
    %157 = vmatpush1.msra.mxu0 0.0
    %158 = vmatprep.subr.mxu0 0.0
    %159 = vmatpush1.msra.mxu0 0.0
    %160 = vmatprep.subr.mxu0 0.0
    %161 = vmatpush1.msra.mxu0 0.0
    %162 = vmatprep.subr.mxu0 0.0
    %163 = vmatpush1.msra.mxu0 0.0
    %164 = vmatprep.subr.mxu0 0.0
    %165 = vmatpush1.msra.mxu0 0.0
    %166 = vmatprep.subr.mxu0 0.0
    %167 = vmatpush1.msra.mxu0 0.0
    %168 = vmatprep.subr.mxu0 0.0
    %169 = vmatpush1.msra.mxu0 %v22
    %170 = vmatprep.subr.mxu0 0.0
    %171 = vmatpush2.msra.mxu0 0.0
    %172 = vmatprep.subr.mxu0 0.0
    %173 = vmatpush2.msra.mxu0 0.0
    %174 = vmatprep.subr.mxu0 0.0
    %175 = vmatpush2.msra.mxu0 0.0
    %176 = vmatprep.subr.mxu0 0.0
    %177 = vmatpush2.msra.mxu0 0.0
    %178 = vmatprep.subr.mxu0 0.0
    %179 = vmatpush2.msra.mxu0 0.0
    %180 = vmatprep.subr.mxu0 0.0
    %181 = vmatpush2.msra.mxu0 0.0
    %182 = vmatprep.subr.mxu0 0.0
    %183 = vmatpush2.msra.mxu0 0.0
    %184 = vmatprep.subr.mxu0 0.0
    %185 = vmatpush2.msra.mxu0 0.0
    %186 = vmatprep.subr.mxu0 0.0
    %187 = vmatpush2.msra.mxu0 0.0
    %188 = vmatprep.subr.mxu0 0.0
    %189 = vmatpush2.msra.mxu0 0.0
    %190 = vmatprep.subr.mxu0 0.0
    %191 = vmatpush2.msra.mxu0 0.0
    %192 = vmatprep.subr.mxu0 0.0
    %193 = vmatpush2.msra.mxu0 0.0
    %194 = vmatprep.subr.mxu0 0.0
    %195 = vmatpush2.msra.mxu0 0.0
    %196 = vmatprep.subr.mxu0 0.0
    %197 = vmatpush2.msra.mxu0 0.0
    %198 = vmatprep.subr.mxu0 0.0
    %199 = vmatpush2.msra.mxu0 0.0
    %200 = vmatprep.subr.mxu0 0.0
    %201 = vmatpush2.msra.mxu0 0.0
    %202 = vmatprep.mubr.f32.mxu0 0.0
    %203 = vmatmul.mubr.f32.gmra.mxu0 %v133
    %v204 = vpop.f32.mrf.mxu0
    %v205 = vadd.f32 %v131, %v204
    %v206 = vpop.f32.mrf.mxu0
    %207 = vmatprep.mubr.f32.mxu0 0.0
    %208 = vmatmul.mubr.f32.gmra.mxu0 %v136
    %v209 = vpop.f32.mrf.mxu0
    %v210 = vadd.f32 %v131, %v209
    %v211 = vpop.f32.mrf.mxu0
    %212 = vdwg.mxu0
    %vm213 = vcmask 261120
    %v215 = vsel %vm213, %v118, 0
    %v218 = vsel %vm213, %v123, 0
    %220 = vmatprep.subr.mxu0 0.0
    %221 = vmatpush1.msra.mxu0 0.0
    %222 = vmatprep.subr.mxu0 0.0
    %223 = vmatpush1.msra.mxu0 0.0
    %224 = vmatprep.subr.mxu0 0.0
    %225 = vmatpush1.msra.mxu0 0.0
    %226 = vmatprep.subr.mxu0 0.0
    %227 = vmatpush1.msra.mxu0 0.0
    %228 = vmatprep.subr.mxu0 0.0
    %229 = vmatpush1.msra.mxu0 0.0
    %230 = vmatprep.subr.mxu0 0.0
    %231 = vmatpush1.msra.mxu0 0.0
    %232 = vmatprep.subr.mxu0 0.0
    %233 = vmatpush1.msra.mxu0 0.0
    %234 = vmatprep.subr.mxu0 0.0
    %235 = vmatpush1.msra.mxu0 0.0
    %236 = vmatprep.subr.mxu0 0.0
    %237 = vmatpush1.msra.mxu0 0.0
    %238 = vmatprep.subr.mxu0 0.0
    %239 = vmatpush1.msra.mxu0 0.0
    %240 = vmatprep.subr.mxu0 0.0
    %241 = vmatpush1.msra.mxu0 0.0
    %242 = vmatprep.subr.mxu0 0.0
    %243 = vmatpush1.msra.mxu0 0.0
    %244 = vmatprep.subr.mxu0 0.0
    %245 = vmatpush1.msra.mxu0 %v30
    %246 = vmatprep.subr.mxu0 0.0
    %247 = vmatpush1.msra.mxu0 %v29
    %248 = vmatprep.subr.mxu0 0.0
    %249 = vmatpush1.msra.mxu0 %v28
    %250 = vmatprep.subr.mxu0 0.0
    %251 = vmatpush1.msra.mxu0 %v27
    %252 = vmatprep.subr.mxu0 0.0
    %253 = vmatpush2.msra.mxu0 0.0
    %254 = vmatprep.subr.mxu0 0.0
    %255 = vmatpush2.msra.mxu0 0.0
    %256 = vmatprep.subr.mxu0 0.0
    %257 = vmatpush2.msra.mxu0 0.0
    %258 = vmatprep.subr.mxu0 0.0
    %259 = vmatpush2.msra.mxu0 0.0
    %260 = vmatprep.subr.mxu0 0.0
    %261 = vmatpush2.msra.mxu0 0.0
    %262 = vmatprep.subr.mxu0 0.0
    %263 = vmatpush2.msra.mxu0 0.0
    %264 = vmatprep.subr.mxu0 0.0
    %265 = vmatpush2.msra.mxu0 0.0
    %266 = vmatprep.subr.mxu0 0.0
    %267 = vmatpush2.msra.mxu0 0.0
    %268 = vmatprep.subr.mxu0 0.0
    %269 = vmatpush2.msra.mxu0 0.0
    %270 = vmatprep.subr.mxu0 0.0
    %271 = vmatpush2.msra.mxu0 0.0
    %272 = vmatprep.subr.mxu0 0.0
    %273 = vmatpush2.msra.mxu0 0.0
    %274 = vmatprep.subr.mxu0 0.0
    %275 = vmatpush2.msra.mxu0 0.0
    %276 = vmatprep.subr.mxu0 0.0
    %277 = vmatpush2.msra.mxu0 0.0
    %278 = vmatprep.subr.mxu0 0.0
    %279 = vmatpush2.msra.mxu0 0.0
    %280 = vmatprep.subr.mxu0 0.0
    %281 = vmatpush2.msra.mxu0 0.0
    %282 = vmatprep.subr.mxu0 0.0
    %283 = vmatpush2.msra.mxu0 0.0
    %284 = vmatprep.mubr.f32.mxu0 0.0
    %285 = vmatmul.mubr.f32.gmra.mxu0 %v215
    %v286 = vpop.f32.mrf.mxu0
    %v287 = vadd.f32 0.0, %v286
    %v288 = vpop.f32.mrf.mxu0
    %289 = vmatprep.mubr.f32.mxu0 0.0
    %290 = vmatmul.mubr.f32.gmra.mxu0 %v218
    %v291 = vpop.f32.mrf.mxu0
    %v292 = vadd.f32 0.0, %v291
    %v293 = vpop.f32.mrf.mxu0
    %294 = vdwg.mxu0
    %v296 = vsel %vm213, %v31, 0
    %v299 = vsel %vm213, %v205, 0
    %v302 = vsel %vm213, %v210, 0
    %304 = vmatprep.subr.mxu0 0.0
    %305 = vmatpush1.xpose.msra.mxu0 0.0
    %306 = vmatprep.subr.mxu0 0.0
    %307 = vmatpush1.xpose.msra.mxu0 0.0
    %308 = vmatprep.subr.mxu0 0.0
    %309 = vmatpush1.xpose.msra.mxu0 0.0
    %310 = vmatprep.subr.mxu0 0.0
    %311 = vmatpush1.xpose.msra.mxu0 0.0
    %312 = vmatprep.subr.mxu0 0.0
    %313 = vmatpush1.xpose.msra.mxu0 0.0
    %314 = vmatprep.subr.mxu0 0.0
    %315 = vmatpush1.xpose.msra.mxu0 0.0
    %316 = vmatprep.subr.mxu0 0.0
    %317 = vmatpush1.xpose.msra.mxu0 0.0
    %318 = vmatprep.subr.mxu0 0.0
    %319 = vmatpush1.xpose.msra.mxu0 0.0
    %320 = vmatprep.subr.mxu0 0.0
    %321 = vmatpush1.xpose.msra.mxu0 0.0
    %322 = vmatprep.subr.mxu0 0.0
    %323 = vmatpush1.xpose.msra.mxu0 0.0
    %324 = vmatprep.subr.mxu0 0.0
    %325 = vmatpush1.xpose.msra.mxu0 0.0
    %326 = vmatprep.subr.mxu0 0.0
    %327 = vmatpush1.xpose.msra.mxu0 0.0
    %328 = vmatprep.subr.mxu0 0.0
    %329 = vmatpush1.xpose.msra.mxu0 0.0
    %330 = vmatprep.subr.mxu0 0.0
    %331 = vmatpush1.xpose.msra.mxu0 0.0
    %332 = vmatprep.subr.mxu0 0.0
    %333 = vmatpush1.xpose.msra.mxu0 %v302
    %334 = vmatprep.subr.mxu0 0.0
    %335 = vmatpush1.xpose.msra.mxu0 %v299
    %336 = vmatprep.subr.mxu0 0.0
    %337 = vmatpush2.xpose.msra.mxu0 0.0
    %338 = vmatprep.subr.mxu0 0.0
    %339 = vmatpush2.xpose.msra.mxu0 0.0
    %340 = vmatprep.subr.mxu0 0.0
    %341 = vmatpush2.xpose.msra.mxu0 0.0
    %342 = vmatprep.subr.mxu0 0.0
    %343 = vmatpush2.xpose.msra.mxu0 0.0
    %344 = vmatprep.subr.mxu0 0.0
    %345 = vmatpush2.xpose.msra.mxu0 0.0
    %346 = vmatprep.subr.mxu0 0.0
    %347 = vmatpush2.xpose.msra.mxu0 0.0
    %348 = vmatprep.subr.mxu0 0.0
    %349 = vmatpush2.xpose.msra.mxu0 0.0
    %350 = vmatprep.subr.mxu0 0.0
    %351 = vmatpush2.xpose.msra.mxu0 0.0
    %352 = vmatprep.subr.mxu0 0.0
    %353 = vmatpush2.xpose.msra.mxu0 0.0
    %354 = vmatprep.subr.mxu0 0.0
    %355 = vmatpush2.xpose.msra.mxu0 0.0
    %356 = vmatprep.subr.mxu0 0.0
    %357 = vmatpush2.xpose.msra.mxu0 0.0
    %358 = vmatprep.subr.mxu0 0.0
    %359 = vmatpush2.xpose.msra.mxu0 0.0
    %360 = vmatprep.subr.mxu0 0.0
    %361 = vmatpush2.xpose.msra.mxu0 0.0
    %362 = vmatprep.subr.mxu0 0.0
    %363 = vmatpush2.xpose.msra.mxu0 0.0
    %364 = vmatprep.subr.mxu0 0.0
    %365 = vmatpush2.xpose.msra.mxu0 0.0
    %366 = vmatprep.subr.mxu0 0.0
    %367 = vmatpush2.xpose.msra.mxu0 0.0
    %368 = vmatprep.mubr.f32.mxu0 0.0
    %369 = vmatmul.mubr.f32.gmra.mxu0 %v296
    %v370 = vpop.f32.mrf.mxu0
    %v371 = vadd.f32 0.0, %v370
    %v372 = vpop.f32.mrf.mxu0
    %373 = vdwg.mxu0
    %v375 = vsel %vm213, %v32, 0
    %377 = vmatprep.subr.mxu0 0.0
    %378 = vmatpush1.xpose.msra.mxu0 0.0
    %379 = vmatprep.subr.mxu0 0.0
    %380 = vmatpush1.xpose.msra.mxu0 0.0
    %381 = vmatprep.subr.mxu0 0.0
    %382 = vmatpush1.xpose.msra.mxu0 0.0
    %383 = vmatprep.subr.mxu0 0.0
    %384 = vmatpush1.xpose.msra.mxu0 0.0
    %385 = vmatprep.subr.mxu0 0.0
    %386 = vmatpush1.xpose.msra.mxu0 0.0
    %387 = vmatprep.subr.mxu0 0.0
    %388 = vmatpush1.xpose.msra.mxu0 0.0
    %389 = vmatprep.subr.mxu0 0.0
    %390 = vmatpush1.xpose.msra.mxu0 0.0
    %391 = vmatprep.subr.mxu0 0.0
    %392 = vmatpush1.xpose.msra.mxu0 0.0
    %393 = vmatprep.subr.mxu0 0.0
    %394 = vmatpush1.xpose.msra.mxu0 0.0
    %395 = vmatprep.subr.mxu0 0.0
    %396 = vmatpush1.xpose.msra.mxu0 0.0
    %397 = vmatprep.subr.mxu0 0.0
    %398 = vmatpush1.xpose.msra.mxu0 0.0
    %399 = vmatprep.subr.mxu0 0.0
    %400 = vmatpush1.xpose.msra.mxu0 0.0
    %401 = vmatprep.subr.mxu0 0.0
    %402 = vmatpush1.xpose.msra.mxu0 0.0
    %403 = vmatprep.subr.mxu0 0.0
    %404 = vmatpush1.xpose.msra.mxu0 0.0
    %405 = vmatprep.subr.mxu0 0.0
    %406 = vmatpush1.xpose.msra.mxu0 %v218
    %407 = vmatprep.subr.mxu0 0.0
    %408 = vmatpush1.xpose.msra.mxu0 %v215
    %409 = vmatprep.subr.mxu0 0.0
    %410 = vmatpush2.xpose.msra.mxu0 0.0
    %411 = vmatprep.subr.mxu0 0.0
    %412 = vmatpush2.xpose.msra.mxu0 0.0
    %413 = vmatprep.subr.mxu0 0.0
    %414 = vmatpush2.xpose.msra.mxu0 0.0
    %415 = vmatprep.subr.mxu0 0.0
    %416 = vmatpush2.xpose.msra.mxu0 0.0
    %417 = vmatprep.subr.mxu0 0.0
    %418 = vmatpush2.xpose.msra.mxu0 0.0
    %419 = vmatprep.subr.mxu0 0.0
    %420 = vmatpush2.xpose.msra.mxu0 0.0
    %421 = vmatprep.subr.mxu0 0.0
    %422 = vmatpush2.xpose.msra.mxu0 0.0
    %423 = vmatprep.subr.mxu0 0.0
    %424 = vmatpush2.xpose.msra.mxu0 0.0
    %425 = vmatprep.subr.mxu0 0.0
    %426 = vmatpush2.xpose.msra.mxu0 0.0
    %427 = vmatprep.subr.mxu0 0.0
    %428 = vmatpush2.xpose.msra.mxu0 0.0
    %429 = vmatprep.subr.mxu0 0.0
    %430 = vmatpush2.xpose.msra.mxu0 0.0
    %431 = vmatprep.subr.mxu0 0.0
    %432 = vmatpush2.xpose.msra.mxu0 0.0
    %433 = vmatprep.subr.mxu0 0.0
    %434 = vmatpush2.xpose.msra.mxu0 0.0
    %435 = vmatprep.subr.mxu0 0.0
    %436 = vmatpush2.xpose.msra.mxu0 0.0
    %437 = vmatprep.subr.mxu0 0.0
    %438 = vmatpush2.xpose.msra.mxu0 0.0
    %439 = vmatprep.subr.mxu0 0.0
    %440 = vmatpush2.xpose.msra.mxu0 0.0
    %441 = vmatprep.mubr.f32.mxu0 0.0
    %442 = vmatmul.mubr.f32.gmra.mxu0 %v375
    %v443 = vpop.f32.mrf.mxu0
    %v444 = vadd.f32 0.0, %v443
    %v445 = vpop.f32.mrf.mxu0
    %446 = vdwg.mxu0
    %v447 = vld [vmem:[%s2] sm:$0xff]
    %v448 = vld [vmem:[%s2 + $0x8] sm:$0xf]
    %vm449 = vcmp.gt.f32.partialorder %v447, 0.0
    %vm450 = vcmp.gt.f32.partialorder %v448, 0.0
    %452 = vset.pattern.permute.xlu0 0
    %453 = vperm.xlu0 %452, %v287
    %v454 = vpop.permute.xlu0 %453
    %457 = vset.pattern.permute.xlu0 0
    %458 = vperm.xlu0 %457, %v292
    %v459 = vpop.permute.xlu0 %458
    %v461 = vlaneseq
    %v462 = vshrl.u32 %v461, 7
    %v463 = vsub.s32 0, %v462
    %v464 = vrot.slane %v371, %v463
    %v465 = vadd.f32 %v454, %v464
    %v466 = vadd.f32 %v459, %v464
    %vm467 = vcmp.gt.f32.partialorder %v465, 0.0
    %vm468 = vcmp.gt.f32.partialorder %v466, 0.0
    %v469 = vmul.f32 %v465, 0.2
    %v470 = vmul.f32 %v466, 0.2
    %v471 = vsel %vm467, %v465, %v469
    %v472 = vsel %vm468, %v466, %v470
    %v473 = vsel %vm449, %v471, -1e+30
    %v474 = vsel %vm450, %v472, -1e+30
    %vm475 = vcmask 80896
    %v476 = vsel %vm475, %v473, -inf
    %477 = vmax.xlane.f32.xlu0 %v476
    %v478 = vpop.xlane.xlu0 %477
    %vm479 = vcmask 76800
    %v480 = vsel %vm479, %v474, -inf
    %481 = vmax.xlane.f32.xlu0 %v480
    %v482 = vpop.xlane.xlu0 %481
    %v483 = vsub.f32 %v473, %v478
    %v484 = vsub.f32 %v474, %v482
    %v485 = vmul.f32 %v483, 1.442695
    %v486 = vpow.pop %v485
    %v487 = vmul.f32 %v484, 1.442695
    %v488 = vpow.pop %v487
    %v489 = vsel %vm449, %v486, 0.0
    %v490 = vsel %vm450, %v488, 0.0
    %v491 = vsel %vm475, %v489, 0.0
    %492 = vadd.xlane.f32.xlu0 %v491
    %v493 = vpop.xlane.xlu0 %492
    %v494 = vsel %vm479, %v490, 0.0
    %495 = vadd.xlane.f32.xlu0 %v494
    %v496 = vpop.xlane.xlu0 %495
    %v497 = vmax.f32 %v493, 1e-30
    %v498 = vmax.f32 %v496, 1e-30
    %v499 = vrcp.pop %v497
    %v500 = vrcp.pop %v498
    %v501 = vmul.f32 %v489, %v499
    %v502 = vmul.f32 %v490, %v500
    %v503 = vlaneseq
    %v504 = vshrl.u32 %v503, 7
    %v505 = vsub.s32 0, %v504
    %v506 = vrot.slane %v33, %v505
    %v507 = vmul.f32 %v205, %v506
    %v508 = vmul.f32 %v210, %v506
    %509 = vset.pattern.permute.xlu0 1
    %510 = vperm.xlu0 %509, %v287
    %v511 = vpop.permute.xlu0 %510
    %513 = vset.pattern.permute.xlu0 1
    %514 = vperm.xlu0 %513, %v292
    %v515 = vpop.permute.xlu0 %514
    %v517 = vlaneseq
    %v518 = vshrl.u32 %v517, 7
    %v519 = vsub.s32 1, %v518
    %v520 = vrot.slane %v371, %v519
    %v521 = vadd.f32 %v511, %v520
    %v522 = vadd.f32 %v515, %v520
    %vm523 = vcmp.gt.f32.partialorder %v521, 0.0
    %vm524 = vcmp.gt.f32.partialorder %v522, 0.0
    %v525 = vmul.f32 %v521, 0.2
    %v526 = vmul.f32 %v522, 0.2
    %v527 = vsel %vm523, %v521, %v525
    %v528 = vsel %vm524, %v522, %v526
    %v529 = vsel %vm449, %v527, -1e+30
    %v530 = vsel %vm450, %v528, -1e+30
    %v531 = vsel %vm475, %v529, -inf
    %532 = vmax.xlane.f32.xlu0 %v531
    %v533 = vpop.xlane.xlu0 %532
    %v534 = vsel %vm479, %v530, -inf
    %535 = vmax.xlane.f32.xlu0 %v534
    %v536 = vpop.xlane.xlu0 %535
    %v537 = vsub.f32 %v529, %v533
    %v538 = vsub.f32 %v530, %v536
    %v539 = vmul.f32 %v537, 1.442695
    %v540 = vpow.pop %v539
    %v541 = vmul.f32 %v538, 1.442695
    %v542 = vpow.pop %v541
    %v543 = vsel %vm449, %v540, 0.0
    %v544 = vsel %vm450, %v542, 0.0
    %v545 = vsel %vm475, %v543, 0.0
    %546 = vadd.xlane.f32.xlu0 %v545
    %v547 = vpop.xlane.xlu0 %546
    %v548 = vsel %vm479, %v544, 0.0
    %549 = vadd.xlane.f32.xlu0 %v548
    %v550 = vpop.xlane.xlu0 %549
    %v551 = vmax.f32 %v547, 1e-30
    %v552 = vmax.f32 %v550, 1e-30
    %v553 = vrcp.pop %v551
    %v554 = vrcp.pop %v552
    %v555 = vmul.f32 %v543, %v553
    %v556 = vmul.f32 %v544, %v554
    %v557 = vlaneseq
    %v558 = vshrl.u32 %v557, 7
    %v559 = vsub.s32 1, %v558
    %v560 = vrot.slane %v33, %v559
    %v561 = vmul.f32 %v205, %v560
    %v562 = vmul.f32 %v210, %v560
    %563 = vset.pattern.permute.xlu0 2
    %564 = vperm.xlu0 %563, %v287
    %v565 = vpop.permute.xlu0 %564
    %567 = vset.pattern.permute.xlu0 2
    %568 = vperm.xlu0 %567, %v292
    %v569 = vpop.permute.xlu0 %568
    %v571 = vlaneseq
    %v572 = vshrl.u32 %v571, 7
    %v573 = vsub.s32 2, %v572
    %v574 = vrot.slane %v371, %v573
    %v575 = vadd.f32 %v565, %v574
    %v576 = vadd.f32 %v569, %v574
    %vm577 = vcmp.gt.f32.partialorder %v575, 0.0
    %vm578 = vcmp.gt.f32.partialorder %v576, 0.0
    %v579 = vmul.f32 %v575, 0.2
    %v580 = vmul.f32 %v576, 0.2
    %v581 = vsel %vm577, %v575, %v579
    %v582 = vsel %vm578, %v576, %v580
    %v583 = vsel %vm449, %v581, -1e+30
    %v584 = vsel %vm450, %v582, -1e+30
    %v585 = vsel %vm475, %v583, -inf
    %586 = vmax.xlane.f32.xlu0 %v585
    %v587 = vpop.xlane.xlu0 %586
    %v588 = vsel %vm479, %v584, -inf
    %589 = vmax.xlane.f32.xlu0 %v588
    %v590 = vpop.xlane.xlu0 %589
    %v591 = vsub.f32 %v583, %v587
    %v592 = vsub.f32 %v584, %v590
    %v593 = vmul.f32 %v591, 1.442695
    %v594 = vpow.pop %v593
    %v595 = vmul.f32 %v592, 1.442695
    %v596 = vpow.pop %v595
    %v597 = vsel %vm449, %v594, 0.0
    %v598 = vsel %vm450, %v596, 0.0
    %v599 = vsel %vm475, %v597, 0.0
    %600 = vadd.xlane.f32.xlu0 %v599
    %v601 = vpop.xlane.xlu0 %600
    %v602 = vsel %vm479, %v598, 0.0
    %603 = vadd.xlane.f32.xlu0 %v602
    %v604 = vpop.xlane.xlu0 %603
    %v605 = vmax.f32 %v601, 1e-30
    %v606 = vmax.f32 %v604, 1e-30
    %v607 = vrcp.pop %v605
    %v608 = vrcp.pop %v606
    %v609 = vmul.f32 %v597, %v607
    %v610 = vmul.f32 %v598, %v608
    %v611 = vlaneseq
    %v612 = vshrl.u32 %v611, 7
    %v613 = vsub.s32 2, %v612
    %v614 = vrot.slane %v33, %v613
    %v615 = vmul.f32 %v205, %v614
    %v616 = vmul.f32 %v210, %v614
    %617 = vset.pattern.permute.xlu0 3
    %618 = vperm.xlu0 %617, %v287
    %v619 = vpop.permute.xlu0 %618
    %621 = vset.pattern.permute.xlu0 3
    %622 = vperm.xlu0 %621, %v292
    %v623 = vpop.permute.xlu0 %622
    %v625 = vlaneseq
    %v626 = vshrl.u32 %v625, 7
    %v627 = vsub.s32 3, %v626
    %v628 = vrot.slane %v371, %v627
    %v629 = vadd.f32 %v619, %v628
    %v630 = vadd.f32 %v623, %v628
    %vm631 = vcmp.gt.f32.partialorder %v629, 0.0
    %vm632 = vcmp.gt.f32.partialorder %v630, 0.0
    %v633 = vmul.f32 %v629, 0.2
    %v634 = vmul.f32 %v630, 0.2
    %v635 = vsel %vm631, %v629, %v633
    %v636 = vsel %vm632, %v630, %v634
    %v637 = vsel %vm449, %v635, -1e+30
    %v638 = vsel %vm450, %v636, -1e+30
    %v639 = vsel %vm475, %v637, -inf
    %640 = vmax.xlane.f32.xlu0 %v639
    %v641 = vpop.xlane.xlu0 %640
    %v642 = vsel %vm479, %v638, -inf
    %643 = vmax.xlane.f32.xlu0 %v642
    %v644 = vpop.xlane.xlu0 %643
    %v645 = vsub.f32 %v637, %v641
    %v646 = vsub.f32 %v638, %v644
    %v647 = vmul.f32 %v645, 1.442695
    %v648 = vpow.pop %v647
    %v649 = vmul.f32 %v646, 1.442695
    %v650 = vpow.pop %v649
    %v651 = vsel %vm449, %v648, 0.0
    %v652 = vsel %vm450, %v650, 0.0
    %v653 = vsel %vm475, %v651, 0.0
    %654 = vadd.xlane.f32.xlu0 %v653
    %v655 = vpop.xlane.xlu0 %654
    %v656 = vsel %vm479, %v652, 0.0
    %657 = vadd.xlane.f32.xlu0 %v656
    %v658 = vpop.xlane.xlu0 %657
    %v659 = vmax.f32 %v655, 1e-30
    %v660 = vmax.f32 %v658, 1e-30
    %v661 = vrcp.pop %v659
    %v662 = vrcp.pop %v660
    %v663 = vmul.f32 %v651, %v661
    %v664 = vmul.f32 %v652, %v662
    %v665 = vlaneseq
    %v666 = vshrl.u32 %v665, 7
    %v667 = vsub.s32 3, %v666
    %v668 = vrot.slane %v33, %v667
    %v669 = vmul.f32 %v205, %v668
    %v670 = vmul.f32 %v210, %v668
    %673 = vrot.lane.b32.xlu0 %v555, 10
    %v674 = vpop.permute.xlu0 %673
    %675 = vrot.lane.b32.xlu0 %v556, 10
    %v676 = vpop.permute.xlu0 %675
    %681 = vrot.lane.b32.xlu0 %v609, 20
    %v682 = vpop.permute.xlu0 %681
    %683 = vrot.lane.b32.xlu0 %v610, 20
    %v684 = vpop.permute.xlu0 %683
    %689 = vrot.lane.b32.xlu0 %v663, 30
    %v690 = vpop.permute.xlu0 %689
    %691 = vrot.lane.b32.xlu0 %v664, 30
    %v692 = vpop.permute.xlu0 %691
    %v695 = vsel %vm475, %v501, %v674
    %v696 = vsel %vm475, %v502, %v676
    %vm697 = vcmask 162816
    %v698 = vsel %vm697, %v695, %v682
    %v699 = vsel %vm697, %v696, %v684
    %vm700 = vcmask 244736
    %v701 = vsel %vm700, %v698, %v690
    %v702 = vsel %vm700, %v699, %v692
    %vm705 = vcmask 1041408
    %v706 = vrot.slane %v561, 6
    %v707 = vrot.slane %v562, 6
    %v708 = vsel %vm705, %v706, %v707
    %vm713 = vcmask 1043456
    %v714 = vrot.slane %v615, 4
    %v715 = vrot.slane %v616, 4
    %v716 = vsel %vm713, %v714, %v715
    %vm721 = vcmask 1045504
    %v722 = vrot.slane %v669, 2
    %v723 = vrot.slane %v670, 2
    %v724 = vsel %vm721, %v722, %v723
    %v727 = vsel %vm705, %v508, %v706
    %v728 = vsel %vm713, %v708, %v714
    %v729 = vsel %vm721, %v716, %v722
    %vm730 = vcmask 326656
    %v732 = vsel %vm730, %v701, 0
    %v735 = vsel %vm730, %v702, 0
    %737 = vmatprep.subr.mxu0 0.0
    %738 = vmatpush1.msra.mxu0 0.0
    %739 = vmatprep.subr.mxu0 0.0
    %740 = vmatpush1.msra.mxu0 0.0
    %741 = vmatprep.subr.mxu0 0.0
    %742 = vmatpush1.msra.mxu0 0.0
    %743 = vmatprep.subr.mxu0 0.0
    %744 = vmatpush1.msra.mxu0 0.0
    %745 = vmatprep.subr.mxu0 0.0
    %746 = vmatpush1.msra.mxu0 0.0
    %747 = vmatprep.subr.mxu0 0.0
    %748 = vmatpush1.msra.mxu0 0.0
    %749 = vmatprep.subr.mxu0 0.0
    %750 = vmatpush1.msra.mxu0 0.0
    %751 = vmatprep.subr.mxu0 0.0
    %752 = vmatpush1.msra.mxu0 0.0
    %753 = vmatprep.subr.mxu0 0.0
    %754 = vmatpush1.msra.mxu0 0.0
    %755 = vmatprep.subr.mxu0 0.0
    %756 = vmatpush1.msra.mxu0 0.0
    %757 = vmatprep.subr.mxu0 0.0
    %758 = vmatpush1.msra.mxu0 0.0
    %759 = vmatprep.subr.mxu0 0.0
    %760 = vmatpush1.msra.mxu0 %v724
    %761 = vmatprep.subr.mxu0 0.0
    %762 = vmatpush1.msra.mxu0 %v729
    %763 = vmatprep.subr.mxu0 0.0
    %764 = vmatpush1.msra.mxu0 %v728
    %765 = vmatprep.subr.mxu0 0.0
    %766 = vmatpush1.msra.mxu0 %v727
    %767 = vmatprep.subr.mxu0 0.0
    %768 = vmatpush1.msra.mxu0 %v507
    %769 = vmatprep.subr.mxu0 0.0
    %770 = vmatpush2.msra.mxu0 0.0
    %771 = vmatprep.subr.mxu0 0.0
    %772 = vmatpush2.msra.mxu0 0.0
    %773 = vmatprep.subr.mxu0 0.0
    %774 = vmatpush2.msra.mxu0 0.0
    %775 = vmatprep.subr.mxu0 0.0
    %776 = vmatpush2.msra.mxu0 0.0
    %777 = vmatprep.subr.mxu0 0.0
    %778 = vmatpush2.msra.mxu0 0.0
    %779 = vmatprep.subr.mxu0 0.0
    %780 = vmatpush2.msra.mxu0 0.0
    %781 = vmatprep.subr.mxu0 0.0
    %782 = vmatpush2.msra.mxu0 0.0
    %783 = vmatprep.subr.mxu0 0.0
    %784 = vmatpush2.msra.mxu0 0.0
    %785 = vmatprep.subr.mxu0 0.0
    %786 = vmatpush2.msra.mxu0 0.0
    %787 = vmatprep.subr.mxu0 0.0
    %788 = vmatpush2.msra.mxu0 0.0
    %789 = vmatprep.subr.mxu0 0.0
    %790 = vmatpush2.msra.mxu0 0.0
    %791 = vmatprep.subr.mxu0 0.0
    %792 = vmatpush2.msra.mxu0 0.0
    %793 = vmatprep.subr.mxu0 0.0
    %794 = vmatpush2.msra.mxu0 0.0
    %795 = vmatprep.subr.mxu0 0.0
    %796 = vmatpush2.msra.mxu0 0.0
    %797 = vmatprep.subr.mxu0 0.0
    %798 = vmatpush2.msra.mxu0 0.0
    %799 = vmatprep.subr.mxu0 0.0
    %800 = vmatpush2.msra.mxu0 0.0
    %801 = vmatprep.mubr.f32.mxu0 0.0
    %802 = vmatmul.mubr.f32.gmra.mxu0 %v732
    %v803 = vpop.f32.mrf.mxu0
    %v804 = vadd.f32 0.0, %v803
    %v805 = vpop.f32.mrf.mxu0
    %806 = vmatprep.mubr.f32.mxu0 0.0
    %807 = vmatmul.mubr.f32.gmra.mxu0 %v735
    %v808 = vpop.f32.mrf.mxu0
    %v809 = vadd.f32 0.0, %v808
    %v810 = vpop.f32.mrf.mxu0
    %811 = vdwg.mxu0
    %v812 = vmax.f32 %v804, 0.0
    %v813 = vmax.f32 %v809, 0.0
    %v814 = vld [vmem:[%s3] sm:$0xff]
    %v815 = vld [vmem:[%s3 + $0x8] sm:$0xf]
    %vm816 = vcmp.gt.f32.partialorder %v814, 0.0
    %vm817 = vcmp.gt.f32.partialorder %v815, 0.0
    %818 = vset.pattern.permute.xlu0 4
    %819 = vperm.xlu0 %818, %v287
    %v820 = vpop.permute.xlu0 %819
    %822 = vset.pattern.permute.xlu0 4
    %823 = vperm.xlu0 %822, %v292
    %v824 = vpop.permute.xlu0 %823
    %v826 = vlaneseq
    %v827 = vshrl.u32 %v826, 7
    %v828 = vsub.s32 0, %v827
    %v829 = vrot.slane %v444, %v828
    %v830 = vadd.f32 %v820, %v829
    %v831 = vadd.f32 %v824, %v829
    %vm832 = vcmp.gt.f32.partialorder %v830, 0.0
    %vm833 = vcmp.gt.f32.partialorder %v831, 0.0
    %v834 = vmul.f32 %v830, 0.2
    %v835 = vmul.f32 %v831, 0.2
    %v836 = vsel %vm832, %v830, %v834
    %v837 = vsel %vm833, %v831, %v835
    %v838 = vsel %vm816, %v836, -1e+30
    %v839 = vsel %vm817, %v837, -1e+30
    %vm840 = vcmask 97280
    %v841 = vsel %vm840, %v838, -inf
    %842 = vmax.xlane.f32.xlu0 %v841
    %v843 = vpop.xlane.xlu0 %842
    %vm844 = vcmask 93184
    %v845 = vsel %vm844, %v839, -inf
    %846 = vmax.xlane.f32.xlu0 %v845
    %v847 = vpop.xlane.xlu0 %846
    %v848 = vsub.f32 %v838, %v843
    %v849 = vsub.f32 %v839, %v847
    %v850 = vmul.f32 %v848, 1.442695
    %v851 = vpow.pop %v850
    %v852 = vmul.f32 %v849, 1.442695
    %v853 = vpow.pop %v852
    %v854 = vsel %vm816, %v851, 0.0
    %v855 = vsel %vm817, %v853, 0.0
    %v856 = vsel %vm840, %v854, 0.0
    %857 = vadd.xlane.f32.xlu0 %v856
    %v858 = vpop.xlane.xlu0 %857
    %v859 = vsel %vm844, %v855, 0.0
    %860 = vadd.xlane.f32.xlu0 %v859
    %v861 = vpop.xlane.xlu0 %860
    %v862 = vmax.f32 %v858, 1e-30
    %v863 = vmax.f32 %v861, 1e-30
    %v864 = vrcp.pop %v862
    %v865 = vrcp.pop %v863
    %v866 = vmul.f32 %v854, %v864
    %v867 = vmul.f32 %v855, %v865
    %v868 = vmul.f32 %v118, %v506
    %v869 = vmul.f32 %v123, %v506
    %870 = vset.pattern.permute.xlu0 5
    %871 = vperm.xlu0 %870, %v287
    %v872 = vpop.permute.xlu0 %871
    %874 = vset.pattern.permute.xlu0 5
    %875 = vperm.xlu0 %874, %v292
    %v876 = vpop.permute.xlu0 %875
    %v878 = vlaneseq
    %v879 = vshrl.u32 %v878, 7
    %v880 = vsub.s32 1, %v879
    %v881 = vrot.slane %v444, %v880
    %v882 = vadd.f32 %v872, %v881
    %v883 = vadd.f32 %v876, %v881
    %vm884 = vcmp.gt.f32.partialorder %v882, 0.0
    %vm885 = vcmp.gt.f32.partialorder %v883, 0.0
    %v886 = vmul.f32 %v882, 0.2
    %v887 = vmul.f32 %v883, 0.2
    %v888 = vsel %vm884, %v882, %v886
    %v889 = vsel %vm885, %v883, %v887
    %v890 = vsel %vm816, %v888, -1e+30
    %v891 = vsel %vm817, %v889, -1e+30
    %v892 = vsel %vm840, %v890, -inf
    %893 = vmax.xlane.f32.xlu0 %v892
    %v894 = vpop.xlane.xlu0 %893
    %v895 = vsel %vm844, %v891, -inf
    %896 = vmax.xlane.f32.xlu0 %v895
    %v897 = vpop.xlane.xlu0 %896
    %v898 = vsub.f32 %v890, %v894
    %v899 = vsub.f32 %v891, %v897
    %v900 = vmul.f32 %v898, 1.442695
    %v901 = vpow.pop %v900
    %v902 = vmul.f32 %v899, 1.442695
    %v903 = vpow.pop %v902
    %v904 = vsel %vm816, %v901, 0.0
    %v905 = vsel %vm817, %v903, 0.0
    %v906 = vsel %vm840, %v904, 0.0
    %907 = vadd.xlane.f32.xlu0 %v906
    %v908 = vpop.xlane.xlu0 %907
    %v909 = vsel %vm844, %v905, 0.0
    %910 = vadd.xlane.f32.xlu0 %v909
    %v911 = vpop.xlane.xlu0 %910
    %v912 = vmax.f32 %v908, 1e-30
    %v913 = vmax.f32 %v911, 1e-30
    %v914 = vrcp.pop %v912
    %v915 = vrcp.pop %v913
    %v916 = vmul.f32 %v904, %v914
    %v917 = vmul.f32 %v905, %v915
    %v918 = vmul.f32 %v118, %v560
    %v919 = vmul.f32 %v123, %v560
    %920 = vset.pattern.permute.xlu0 6
    %921 = vperm.xlu0 %920, %v287
    %v922 = vpop.permute.xlu0 %921
    %924 = vset.pattern.permute.xlu0 6
    %925 = vperm.xlu0 %924, %v292
    %v926 = vpop.permute.xlu0 %925
    %v928 = vlaneseq
    %v929 = vshrl.u32 %v928, 7
    %v930 = vsub.s32 2, %v929
    %v931 = vrot.slane %v444, %v930
    %v932 = vadd.f32 %v922, %v931
    %v933 = vadd.f32 %v926, %v931
    %vm934 = vcmp.gt.f32.partialorder %v932, 0.0
    %vm935 = vcmp.gt.f32.partialorder %v933, 0.0
    %v936 = vmul.f32 %v932, 0.2
    %v937 = vmul.f32 %v933, 0.2
    %v938 = vsel %vm934, %v932, %v936
    %v939 = vsel %vm935, %v933, %v937
    %v940 = vsel %vm816, %v938, -1e+30
    %v941 = vsel %vm817, %v939, -1e+30
    %v942 = vsel %vm840, %v940, -inf
    %943 = vmax.xlane.f32.xlu0 %v942
    %v944 = vpop.xlane.xlu0 %943
    %v945 = vsel %vm844, %v941, -inf
    %946 = vmax.xlane.f32.xlu0 %v945
    %v947 = vpop.xlane.xlu0 %946
    %v948 = vsub.f32 %v940, %v944
    %v949 = vsub.f32 %v941, %v947
    %v950 = vmul.f32 %v948, 1.442695
    %v951 = vpow.pop %v950
    %v952 = vmul.f32 %v949, 1.442695
    %v953 = vpow.pop %v952
    %v954 = vsel %vm816, %v951, 0.0
    %v955 = vsel %vm817, %v953, 0.0
    %v956 = vsel %vm840, %v954, 0.0
    %957 = vadd.xlane.f32.xlu0 %v956
    %v958 = vpop.xlane.xlu0 %957
    %v959 = vsel %vm844, %v955, 0.0
    %960 = vadd.xlane.f32.xlu0 %v959
    %v961 = vpop.xlane.xlu0 %960
    %v962 = vmax.f32 %v958, 1e-30
    %v963 = vmax.f32 %v961, 1e-30
    %v964 = vrcp.pop %v962
    %v965 = vrcp.pop %v963
    %v966 = vmul.f32 %v954, %v964
    %v967 = vmul.f32 %v955, %v965
    %v968 = vmul.f32 %v118, %v614
    %v969 = vmul.f32 %v123, %v614
    %970 = vset.pattern.permute.xlu0 7
    %971 = vperm.xlu0 %970, %v287
    %v972 = vpop.permute.xlu0 %971
    %974 = vset.pattern.permute.xlu0 7
    %975 = vperm.xlu0 %974, %v292
    %v976 = vpop.permute.xlu0 %975
    %v978 = vlaneseq
    %v979 = vshrl.u32 %v978, 7
    %v980 = vsub.s32 3, %v979
    %v981 = vrot.slane %v444, %v980
    %v982 = vadd.f32 %v972, %v981
    %v983 = vadd.f32 %v976, %v981
    %vm984 = vcmp.gt.f32.partialorder %v982, 0.0
    %vm985 = vcmp.gt.f32.partialorder %v983, 0.0
    %v986 = vmul.f32 %v982, 0.2
    %v987 = vmul.f32 %v983, 0.2
    %v988 = vsel %vm984, %v982, %v986
    %v989 = vsel %vm985, %v983, %v987
    %v990 = vsel %vm816, %v988, -1e+30
    %v991 = vsel %vm817, %v989, -1e+30
    %v992 = vsel %vm840, %v990, -inf
    %993 = vmax.xlane.f32.xlu0 %v992
    %v994 = vpop.xlane.xlu0 %993
    %v995 = vsel %vm844, %v991, -inf
    %996 = vmax.xlane.f32.xlu0 %v995
    %v997 = vpop.xlane.xlu0 %996
    %v998 = vsub.f32 %v990, %v994
    %v999 = vsub.f32 %v991, %v997
    %v1000 = vmul.f32 %v998, 1.442695
    %v1001 = vpow.pop %v1000
    %v1002 = vmul.f32 %v999, 1.442695
    %v1003 = vpow.pop %v1002
    %v1004 = vsel %vm816, %v1001, 0.0
    %v1005 = vsel %vm817, %v1003, 0.0
    %v1006 = vsel %vm840, %v1004, 0.0
    %1007 = vadd.xlane.f32.xlu0 %v1006
    %v1008 = vpop.xlane.xlu0 %1007
    %v1009 = vsel %vm844, %v1005, 0.0
    %1010 = vadd.xlane.f32.xlu0 %v1009
    %v1011 = vpop.xlane.xlu0 %1010
    %v1012 = vmax.f32 %v1008, 1e-30
    %v1013 = vmax.f32 %v1011, 1e-30
    %v1014 = vrcp.pop %v1012
    %v1015 = vrcp.pop %v1013
    %v1016 = vmul.f32 %v1004, %v1014
    %v1017 = vmul.f32 %v1005, %v1015
    %v1018 = vmul.f32 %v118, %v668
    %v1019 = vmul.f32 %v123, %v668
    %1022 = vrot.lane.b32.xlu0 %v916, 12
    %v1023 = vpop.permute.xlu0 %1022
    %1024 = vrot.lane.b32.xlu0 %v917, 12
    %v1025 = vpop.permute.xlu0 %1024
    %1030 = vrot.lane.b32.xlu0 %v966, 24
    %v1031 = vpop.permute.xlu0 %1030
    %1032 = vrot.lane.b32.xlu0 %v967, 24
    %v1033 = vpop.permute.xlu0 %1032
    %1038 = vrot.lane.b32.xlu0 %v1016, 36
    %v1039 = vpop.permute.xlu0 %1038
    %1040 = vrot.lane.b32.xlu0 %v1017, 36
    %v1041 = vpop.permute.xlu0 %1040
    %v1044 = vsel %vm840, %v866, %v1023
    %v1045 = vsel %vm840, %v867, %v1025
    %vm1046 = vcmask 195584
    %v1047 = vsel %vm1046, %v1044, %v1031
    %v1048 = vsel %vm1046, %v1045, %v1033
    %vm1049 = vcmask 293888
    %v1050 = vsel %vm1049, %v1047, %v1039
    %v1051 = vsel %vm1049, %v1048, %v1041
    %v1054 = vrot.slane %v918, 4
    %v1055 = vrot.slane %v919, 4
    %v1056 = vsel %vm713, %v1054, %v1055
    %v1061 = vrot.slane %v1018, 4
    %v1062 = vrot.slane %v1019, 4
    %v1063 = vsel %vm713, %v1061, %v1062
    %v1066 = vsel %vm713, %v869, %v1054
    %v1067 = vsel %vm713, %v969, %v1061
    %vm1068 = vcmask 392192
    %v1070 = vsel %vm1068, %v1050, 0
    %v1073 = vsel %vm1068, %v1051, 0
    %1075 = vmatprep.subr.mxu0 0.0
    %1076 = vmatpush1.msra.mxu0 0.0
    %1077 = vmatprep.subr.mxu0 0.0
    %1078 = vmatpush1.msra.mxu0 0.0
    %1079 = vmatprep.subr.mxu0 0.0
    %1080 = vmatpush1.msra.mxu0 0.0
    %1081 = vmatprep.subr.mxu0 0.0
    %1082 = vmatpush1.msra.mxu0 0.0
    %1083 = vmatprep.subr.mxu0 0.0
    %1084 = vmatpush1.msra.mxu0 0.0
    %1085 = vmatprep.subr.mxu0 0.0
    %1086 = vmatpush1.msra.mxu0 0.0
    %1087 = vmatprep.subr.mxu0 0.0
    %1088 = vmatpush1.msra.mxu0 0.0
    %1089 = vmatprep.subr.mxu0 0.0
    %1090 = vmatpush1.msra.mxu0 0.0
    %1091 = vmatprep.subr.mxu0 0.0
    %1092 = vmatpush1.msra.mxu0 0.0
    %1093 = vmatprep.subr.mxu0 0.0
    %1094 = vmatpush1.msra.mxu0 0.0
    %1095 = vmatprep.subr.mxu0 0.0
    %1096 = vmatpush1.msra.mxu0 %v1063
    %1097 = vmatprep.subr.mxu0 0.0
    %1098 = vmatpush1.msra.mxu0 %v1067
    %1099 = vmatprep.subr.mxu0 0.0
    %1100 = vmatpush1.msra.mxu0 %v968
    %1101 = vmatprep.subr.mxu0 0.0
    %1102 = vmatpush1.msra.mxu0 %v1056
    %1103 = vmatprep.subr.mxu0 0.0
    %1104 = vmatpush1.msra.mxu0 %v1066
    %1105 = vmatprep.subr.mxu0 0.0
    %1106 = vmatpush1.msra.mxu0 %v868
    %1107 = vmatprep.subr.mxu0 0.0
    %1108 = vmatpush2.msra.mxu0 0.0
    %1109 = vmatprep.subr.mxu0 0.0
    %1110 = vmatpush2.msra.mxu0 0.0
    %1111 = vmatprep.subr.mxu0 0.0
    %1112 = vmatpush2.msra.mxu0 0.0
    %1113 = vmatprep.subr.mxu0 0.0
    %1114 = vmatpush2.msra.mxu0 0.0
    %1115 = vmatprep.subr.mxu0 0.0
    %1116 = vmatpush2.msra.mxu0 0.0
    %1117 = vmatprep.subr.mxu0 0.0
    %1118 = vmatpush2.msra.mxu0 0.0
    %1119 = vmatprep.subr.mxu0 0.0
    %1120 = vmatpush2.msra.mxu0 0.0
    %1121 = vmatprep.subr.mxu0 0.0
    %1122 = vmatpush2.msra.mxu0 0.0
    %1123 = vmatprep.subr.mxu0 0.0
    %1124 = vmatpush2.msra.mxu0 0.0
    %1125 = vmatprep.subr.mxu0 0.0
    %1126 = vmatpush2.msra.mxu0 0.0
    %1127 = vmatprep.subr.mxu0 0.0
    %1128 = vmatpush2.msra.mxu0 0.0
    %1129 = vmatprep.subr.mxu0 0.0
    %1130 = vmatpush2.msra.mxu0 0.0
    %1131 = vmatprep.subr.mxu0 0.0
    %1132 = vmatpush2.msra.mxu0 0.0
    %1133 = vmatprep.subr.mxu0 0.0
    %1134 = vmatpush2.msra.mxu0 0.0
    %1135 = vmatprep.subr.mxu0 0.0
    %1136 = vmatpush2.msra.mxu0 0.0
    %1137 = vmatprep.subr.mxu0 0.0
    %1138 = vmatpush2.msra.mxu0 0.0
    %1139 = vmatprep.mubr.f32.mxu0 0.0
    %1140 = vmatmul.mubr.f32.gmra.mxu0 %v1070
    %v1141 = vpop.f32.mrf.mxu0
    %v1142 = vadd.f32 0.0, %v1141
    %v1143 = vpop.f32.mrf.mxu0
    %1144 = vmatprep.mubr.f32.mxu0 0.0
    %1145 = vmatmul.mubr.f32.gmra.mxu0 %v1073
    %v1146 = vpop.f32.mrf.mxu0
    %v1147 = vadd.f32 0.0, %v1146
    %v1148 = vpop.f32.mrf.mxu0
    %1149 = vdwg.mxu0
    %v1150 = vmax.f32 %v1142, 0.0
    %v1151 = vmax.f32 %v1147, 0.0
    %v1154 = vrot.slane %v1150, 4
    %v1155 = vrot.slane %v1151, 4
    %v1156 = vsel %vm713, %v1154, %v1155
    %v1158 = vsel %vm713, %v813, %v1154
    %v1159 = vlaneseq
    %v1160 = vshrl.u32 %v1159, 7
    %v1161 = vsub.s32 0, %v1160
    %v1162 = vrot.slane %v36, %v1161
    %v1164 = vsel %vm213, %v812, 0
    %v1167 = vsel %vm213, %v1158, 0
    %v1169 = vsel %vm213, %v1156, 0
    %1171 = vmatprep.subr.mxu0 0.0
    %1172 = vmatpush1.msra.mxu0 0.0
    %1173 = vmatprep.subr.mxu0 0.0
    %1174 = vmatpush1.msra.mxu0 0.0
    %1175 = vmatprep.subr.mxu0 0.0
    %1176 = vmatpush1.msra.mxu0 0.0
    %1177 = vmatprep.subr.mxu0 0.0
    %1178 = vmatpush1.msra.mxu0 0.0
    %1179 = vmatprep.subr.mxu0 0.0
    %1180 = vmatpush1.msra.mxu0 0.0
    %1181 = vmatprep.subr.mxu0 0.0
    %1182 = vmatpush1.msra.mxu0 0.0
    %1183 = vmatprep.subr.mxu0 0.0
    %1184 = vmatpush1.msra.mxu0 0.0
    %1185 = vmatprep.subr.mxu0 0.0
    %1186 = vmatpush1.msra.mxu0 0.0
    %1187 = vmatprep.subr.mxu0 0.0
    %1188 = vmatpush1.msra.mxu0 0.0
    %1189 = vmatprep.subr.mxu0 0.0
    %1190 = vmatpush1.msra.mxu0 0.0
    %1191 = vmatprep.subr.mxu0 0.0
    %1192 = vmatpush1.msra.mxu0 0.0
    %1193 = vmatprep.subr.mxu0 0.0
    %1194 = vmatpush1.msra.mxu0 0.0
    %1195 = vmatprep.subr.mxu0 0.0
    %1196 = vmatpush1.msra.mxu0 %v26
    %1197 = vmatprep.subr.mxu0 0.0
    %1198 = vmatpush1.msra.mxu0 %v25
    %1199 = vmatprep.subr.mxu0 0.0
    %1200 = vmatpush1.msra.mxu0 %v24
    %1201 = vmatprep.subr.mxu0 0.0
    %1202 = vmatpush1.msra.mxu0 %v23
    %1203 = vmatprep.subr.mxu0 0.0
    %1204 = vmatpush2.msra.mxu0 0.0
    %1205 = vmatprep.subr.mxu0 0.0
    %1206 = vmatpush2.msra.mxu0 0.0
    %1207 = vmatprep.subr.mxu0 0.0
    %1208 = vmatpush2.msra.mxu0 0.0
    %1209 = vmatprep.subr.mxu0 0.0
    %1210 = vmatpush2.msra.mxu0 0.0
    %1211 = vmatprep.subr.mxu0 0.0
    %1212 = vmatpush2.msra.mxu0 0.0
    %1213 = vmatprep.subr.mxu0 0.0
    %1214 = vmatpush2.msra.mxu0 0.0
    %1215 = vmatprep.subr.mxu0 0.0
    %1216 = vmatpush2.msra.mxu0 0.0
    %1217 = vmatprep.subr.mxu0 0.0
    %1218 = vmatpush2.msra.mxu0 0.0
    %1219 = vmatprep.subr.mxu0 0.0
    %1220 = vmatpush2.msra.mxu0 0.0
    %1221 = vmatprep.subr.mxu0 0.0
    %1222 = vmatpush2.msra.mxu0 0.0
    %1223 = vmatprep.subr.mxu0 0.0
    %1224 = vmatpush2.msra.mxu0 0.0
    %1225 = vmatprep.subr.mxu0 0.0
    %1226 = vmatpush2.msra.mxu0 0.0
    %1227 = vmatprep.subr.mxu0 0.0
    %1228 = vmatpush2.msra.mxu0 0.0
    %1229 = vmatprep.subr.mxu0 0.0
    %1230 = vmatpush2.msra.mxu0 0.0
    %1231 = vmatprep.subr.mxu0 0.0
    %1232 = vmatpush2.msra.mxu0 0.0
    %1233 = vmatprep.subr.mxu0 0.0
    %1234 = vmatpush2.msra.mxu0 0.0
    %1235 = vmatprep.mubr.f32.mxu0 0.0
    %1236 = vmatmul.mubr.f32.gmra.mxu0 %v1164
    %v1237 = vpop.f32.mrf.mxu0
    %v1238 = vadd.f32 %v1162, %v1237
    %v1239 = vpop.f32.mrf.mxu0
    %1240 = vmatprep.mubr.f32.mxu0 0.0
    %1241 = vmatmul.mubr.f32.gmra.mxu0 %v1167
    %v1242 = vpop.f32.mrf.mxu0
    %v1243 = vadd.f32 %v1162, %v1242
    %v1244 = vpop.f32.mrf.mxu0
    %1245 = vmatprep.mubr.f32.mxu0 0.0
    %1246 = vmatmul.mubr.f32.gmra.mxu0 %v1169
    %v1247 = vpop.f32.mrf.mxu0
    %v1248 = vadd.f32 %v1162, %v1247
    %v1249 = vpop.f32.mrf.mxu0
    %1250 = vdwg.mxu0
    %v1251 = vtanh.pop %v1238
    %v1252 = vtanh.pop %v1243
    %v1253 = vtanh.pop %v1248
    %v1254 = vlaneseq
    %v1255 = vshrl.u32 %v1254, 7
    %v1256 = vsub.s32 0, %v1255
    %v1257 = vrot.slane %v37, %v1256
    %v1258 = vmul.f32 %v1257, %v1251
    %v1259 = vmul.f32 %v1257, %v1252
    %v1260 = vmul.f32 %v1257, %v1253
    %v1261 = vsel %vm213, %v1258, 0.0
    %1262 = vadd.xlane.f32.xlu0 %v1261
    %v1263 = vpop.xlane.xlu0 %1262
    %v1264 = vsel %vm213, %v1259, 0.0
    %1265 = vadd.xlane.f32.xlu0 %v1264
    %v1266 = vpop.xlane.xlu0 %1265
    %v1267 = vsel %vm213, %v1260, 0.0
    %1268 = vadd.xlane.f32.xlu0 %v1267
    %v1269 = vpop.xlane.xlu0 %1268
    %v1270 = vsel %vm713, %v1266, 0.0
    %v1271 = vadd.f32 %v1263, %v1270
    %v1272 = vrot.slane %v1271, 4
    %v1273 = vadd.f32 %v1271, %v1272
    %v1274 = vrot.slane %v1273, 2
    %v1275 = vadd.f32 %v1273, %v1274
    %v1276 = vrot.slane %v1275, 1
    %v1277 = vadd.f32 %v1275, %v1276
    %v1278 = vrcp.pop 12.0
    %v1279 = vmul.f32 %v1277, %v1278
    %v1282 = vrot.slane %v1266, 4
    %v1283 = vrot.slane %v1269, 4
    %v1284 = vsel %vm713, %v1282, %v1283
    %v1287 = vsel %vm713, %v1283, 0.0
    %v1288 = vadd.f32 %v1284, %v1287
    %v1289 = vrot.slane %v1288, 4
    %v1290 = vadd.f32 %v1288, %v1289
    %v1291 = vrot.slane %v1290, 2
    %v1292 = vadd.f32 %v1290, %v1291
    %v1293 = vrot.slane %v1292, 1
    %v1294 = vadd.f32 %v1292, %v1293
    %v1295 = vmul.f32 %v1294, %v1278
    %v1296 = vmax.f32 %v1279, %v1295
    %v1297 = vsub.f32 %v1279, %v1296
    %v1298 = vmul.f32 %v1297, 1.442695
    %v1299 = vpow.pop %v1298
    %v1300 = vsub.f32 %v1295, %v1296
    %v1301 = vmul.f32 %v1300, 1.442695
    %v1302 = vpow.pop %v1301
    %v1303 = vadd.f32 %v1299, %v1302
    %v1304 = vrcp.pop %v1303
    %v1305 = vmul.f32 1.0, %v1304
    %v1306 = vmul.f32 %v1299, %v1305
    %v1307 = vmul.f32 %v1306, %v812
    %v1308 = vmul.f32 %v1306, %v813
    %v1309 = vmul.f32 %v1302, %v1305
    %v1310 = vmul.f32 %v1309, %v1150
    %v1311 = vmul.f32 %v1309, %v1151
    %v1312 = vadd.f32 %v1307, %v1310
    %v1313 = vadd.f32 %v1308, %v1311
    %1314 = vst.msk [vmem:[#allocation2] sm:$0xff] %vm213, %v1312
    %vm1315 = vcmask 257024
    %1316 = vst.msk [vmem:[#allocation2 + $0x8] sm:$0xf] %vm1315, %v1313
    // Predicated region
    $region22: #{han_forward.1} parent=1 // pred_check
      _
    $region23: #{han_forward.1} parent=1 // pred_check_branch
      %1318 = sbr.rel (0) target = $region25
    $region24: #{han_forward.1} parent=1 // pred_region
      %s1320 = ssub.s32 256, 256
      %1321 = vsyncadd [#allocation3], %s1320
      %s1322 = sshll.u32 [#allocation2], 4
      %s1323 = int_to_ptr.vmem [resolvable:$true] %s1322
      %1328 = dma.vmem_to_hbm [thread:$0]  %s1323, 256, %s5, [#allocation3], 128, 128, 8
    $region25: #{han_forward.1} parent=1 // pred_fallthru
      _
    // Predicated region
    $region26: #{han_forward.1} parent=1 // pred_check
      _
    $region27: #{han_forward.1} parent=1 // pred_check_branch
      %1330 = sbr.rel (0) target = $region29
    $region28: #{han_forward.1} parent=1 // pred_region
      %1331 = dma.done [#allocation3], 256
    $region29: #{han_forward.1} parent=1 // pred_fallthru
      _
    %1332 = vsyncpa [#allocation3], 1

</llo_original>
